<compile_context>
chip_gen: v6e
topology: v6e:2x2x1
jax: 0.10.0
libtpu: 0.0.40
codegen_flags: <defaults>
</compile_context>

<pallas_src>
import functools

import jax
import jax.numpy as jnp
import numpy as np
from jax.experimental import pallas as pl
from jax.experimental.pallas import tpu as pltpu


def uni_gru_kernel(x2d_ref, w_all_ref, bias_ref, logits_ref, h_out_ref,
                   *, T, B_pad, B_real, I, H, O):
    TWO_H = 2 * H

    # ---- One-time weight/bias loads. Row offsets (0, I, I+H) are multiples of 8
    # (sublane-aligned); the lane slice at 2H for the n-gate weights is a single
    # one-time relayout, off the serial chain. ------------------------------------
    w_ih_rz = w_all_ref[0:I, 0:TWO_H]                     # (I, 2H)
    w_ih_n = w_all_ref[0:I, TWO_H:3 * H]                  # (I, H)
    w_hh_rz = w_all_ref[I:I + H, 0:TWO_H]                 # (H, 2H)
    w_hh_n = w_all_ref[I:I + H, TWO_H:3 * H]              # (H, H)
    w_fc = w_all_ref[I + H:I + 2 * H, 0:O]                # (H, O)

    gi_rz_bias = bias_ref[0:1, 0:TWO_H]                   # (1, 2H): b_ih_rz + b_hh_rz
    gi_n_bias = bias_ref[1:2, 0:H]                        # (1, H):  b_ih_n
    b_hh_n = bias_ref[2:3, 0:H]                           # (1, H)
    b_fc = bias_ref[3:4, 0:O]                             # (1, O)

    # ---- Hoisted input projection (off the serial chain), one MXU call per gate
    # group for all T steps; biases folded here. ----------------------------------
    x_all = x2d_ref[...]                                  # (T*B_pad, I)
    gi_rz_all = (jnp.dot(x_all, w_ih_rz, preferred_element_type=jnp.float32)
                 + gi_rz_bias)                            # (T*B_pad, 2H)
    gi_n_all = (jnp.dot(x_all, w_ih_n, preferred_element_type=jnp.float32)
                + gi_n_bias)                              # (T*B_pad, H)

    h = jnp.zeros((B_pad, H), jnp.float32)
    last_rows = []                                        # out[:, -1] trajectory

    # T small and static: fully unrolled, every slice static and tile-aligned.
    for t in range(T):
        r0 = t * B_pad                                    # multiple of 8 -> aligned
        gi_rz = gi_rz_all[r0:r0 + B_pad, :]               # (B_pad, 2H)
        gi_n = gi_n_all[r0:r0 + B_pad, :]                 # (B_pad, H)
        # Only serial MXU work: two lane-offset-0 per-gate-group matmuls.
        gh_rz = jnp.dot(h, w_hh_rz, preferred_element_type=jnp.float32)
        gh_n = jnp.dot(h, w_hh_n, preferred_element_type=jnp.float32)
        rz = jax.nn.sigmoid(gi_rz + gh_rz)                # fused r/z: one EUP push
        r = rz[:, 0:H]
        z = rz[:, H:TWO_H]
        n = jnp.tanh(gi_n + r * (gh_n + b_hh_n))          # PyTorch GRU n-gate
        h = n + z * (h - n)                               # == (1-z)*n + z*h
        last_rows.append(h[B_real - 1:B_real, :])         # last real batch element

    h_out_ref[...] = h

    # ---- Head: ReLU -> Linear -> LogSoftmax(dim=1), once after the recurrence. ----
    feat = jnp.maximum(jnp.concatenate(last_rows, axis=0), 0.0)        # (T, H)
    logits = (jnp.dot(feat, w_fc, preferred_element_type=jnp.float32)
              + b_fc)                                                  # (T, O)
    m = jnp.max(logits, axis=1, keepdims=True)
    shifted = logits - m
    lse = jnp.log(jnp.sum(jnp.exp(shifted), axis=1, keepdims=True))
    logits_ref[...] = (shifted - lse).astype(logits_ref.dtype)


@jax.jit
def uni_gru_forward(x, w_ih, w_hh, b_ih, b_hh, w_fc, b_fc):
    """x: (T, B, I) float32. Returns (log_probs (T, O), h (num_layers=1, B, H))."""
    T, B, I = x.shape
    H = w_hh.shape[1]
    O = w_fc.shape[0]
    B_pad = ((B + 7) // 8) * 8                            # sublane-align the batch

    # Zero-pad batch to a full sublane tile and flatten to 2D (tile-exact rows).
    x_p = jnp.pad(x.astype(jnp.float32), ((0, 0), (0, B_pad - B), (0, 0)))
    x2d = x_p.reshape(T * B_pad, I)

    # Per-gate transposed weights (PyTorch gate order [r, z, n]), packed into one
    # buffer: rows [0:I]=input-proj, [I:I+H]=recurrent, [I+H:I+2H]=fc; lanes
    # [0:2H]=r|z group, [2H:3H]=n group (fc uses lanes [0:O]).
    w_ih_f = jnp.asarray(w_ih, jnp.float32)
    w_hh_f = jnp.asarray(w_hh, jnp.float32)
    w_all = jnp.zeros((I + 2 * H, 3 * H), jnp.float32)
    w_all = w_all.at[0:I, 0:2 * H].set(w_ih_f[0:2 * H, :].T)             # (I, 2H)
    w_all = w_all.at[0:I, 2 * H:3 * H].set(w_ih_f[2 * H:3 * H, :].T)     # (I, H)
    w_all = w_all.at[I:I + H, 0:2 * H].set(w_hh_f[0:2 * H, :].T)         # (H, 2H)
    w_all = w_all.at[I:I + H, 2 * H:3 * H].set(w_hh_f[2 * H:3 * H, :].T) # (H, H)
    w_all = w_all.at[I + H:I + 2 * H, 0:O].set(jnp.asarray(w_fc, jnp.float32).T)

    # All biases in one buffer; fold b_hh[r,z] into the hoisted gi bias, keep
    # b_hh_n separate (it sits inside the r*(...) term).
    b_ih_f = jnp.asarray(b_ih, jnp.float32)
    b_hh_f = jnp.asarray(b_hh, jnp.float32)
    bias = jnp.zeros((4, 2 * H), jnp.float32)
    bias = bias.at[0, 0:2 * H].set(b_ih_f[0:2 * H] + b_hh_f[0:2 * H])
    bias = bias.at[1, 0:H].set(b_ih_f[2 * H:3 * H])
    bias = bias.at[2, 0:H].set(b_hh_f[2 * H:3 * H])
    bias = bias.at[3, 0:O].set(jnp.asarray(b_fc, jnp.float32))

    kernel = functools.partial(uni_gru_kernel, T=T, B_pad=B_pad, B_real=B,
                               I=I, H=H, O=O)

    log_probs, h_pad = pl.pallas_call(
        kernel,
        out_shape=(
            jax.ShapeDtypeStruct((T, O), jnp.float32),
            jax.ShapeDtypeStruct((B_pad, H), jnp.float32),
        ),
        # No grid: single invocation; 3 input DMAs + 2 output DMAs, all VMEM-resident.
        in_specs=[pl.BlockSpec(memory_space=pltpu.MemorySpace.VMEM)] * 3,
        out_specs=(pl.BlockSpec(memory_space=pltpu.MemorySpace.VMEM),
                   pl.BlockSpec(memory_space=pltpu.MemorySpace.VMEM)),
    )(x2d, w_all, bias)

    return log_probs, h_pad[:B][None]                     # h shape (num_layers=1, B, H)


def ref_forward(x, w_ih, w_hh, b_ih, b_hh, w_fc, b_fc):
    """Pure-JAX reference mirroring the PyTorch module."""
    T, B, I = x.shape
    H = w_hh.shape[1]
    h = jnp.zeros((B, H), jnp.float32)
    outs = []
    for t in range(T):
        gi = x[t] @ w_ih.T + b_ih
        gh = h @ w_hh.T + b_hh
        r = jax.nn.sigmoid(gi[:, :H] + gh[:, :H])
        z = jax.nn.sigmoid(gi[:, H:2 * H] + gh[:, H:2 * H])
        n = jnp.tanh(gi[:, 2 * H:] + r * gh[:, 2 * H:])
        h = (1.0 - z) * n + z * h
        outs.append(h)
    out = jnp.stack(outs)                      # (T, B, H)
    feat = jax.nn.relu(out[:, -1])             # (T, H) -- last batch element per step
    logits = feat @ w_fc.T + b_fc
    return jax.nn.log_softmax(logits, axis=1), h[None]


if __name__ == "__main__":
    # Small shapes consistent with the module: seq=8, batch=2, input=16, hidden=32, classes=10.
    T, B, I, H, O = 8, 2, 16, 32, 10

    key = jax.random.PRNGKey(0)
    k = jax.random.split(key, 8)
    s = 1.0 / np.sqrt(H)
    x = jax.random.normal(k[0], (T, B, I), jnp.float32)
    w_ih = jax.random.uniform(k[1], (3 * H, I), jnp.float32, -s, s)
    w_hh = jax.random.uniform(k[2], (3 * H, H), jnp.float32, -s, s)
    b_ih = jax.random.uniform(k[3], (3 * H,), jnp.float32, -s, s)
    b_hh = jax.random.uniform(k[4], (3 * H,), jnp.float32, -s, s)
    w_fc = jax.random.uniform(k[5], (O, H), jnp.float32, -s, s)
    b_fc = jax.random.uniform(k[6], (O,), jnp.float32, -s, s)

    out, h = uni_gru_forward(x, w_ih, w_hh, b_ih, b_hh, w_fc, b_fc)
    jax.block_until_ready((out, h))

    out_ref, h_ref = ref_forward(x, w_ih, w_hh, b_ih, b_hh, w_fc, b_fc)
    np.testing.assert_allclose(np.asarray(out), np.asarray(out_ref), atol=1e-5, rtol=1e-5)
    np.testing.assert_allclose(np.asarray(h), np.asarray(h_ref), atol=1e-5, rtol=1e-5)

    print("KERNEL_OK")
</pallas_src>

<mosaic_0001>
module attributes {stable_mosaic.version = 11 : i64} {
  func.func @uni_gru_kernel(%arg0: memref<64x16xf32, #tpu.memory_space<vmem>>, %arg1: memref<80x96xf32, #tpu.memory_space<vmem>>, %arg2: memref<4x64xf32, #tpu.memory_space<vmem>>, %arg3: memref<8x10xf32, #tpu.memory_space<vmem>>, %arg4: memref<8x32xf32, #tpu.memory_space<vmem>>) attributes {dimension_semantics = [], scalar_prefetch = 0 : i64, scratch_operands = 0 : i64, tpu.core_type = #tpu.core_type<tc>} {
    %c0 = arith.constant 0 : index
    %c0_0 = arith.constant 0 : index
    %0 = vector.load %arg1[%c0, %c0_0] : memref<80x96xf32, #tpu.memory_space<vmem>>, vector<16x64xf32>
    %c0_1 = arith.constant 0 : index
    %c64 = arith.constant 64 : index
    %1 = vector.load %arg1[%c0_1, %c64] : memref<80x96xf32, #tpu.memory_space<vmem>>, vector<16x32xf32>
    %c16 = arith.constant 16 : index
    %c0_2 = arith.constant 0 : index
    %2 = vector.load %arg1[%c16, %c0_2] : memref<80x96xf32, #tpu.memory_space<vmem>>, vector<32x64xf32>
    %c16_3 = arith.constant 16 : index
    %c64_4 = arith.constant 64 : index
    %3 = vector.load %arg1[%c16_3, %c64_4] : memref<80x96xf32, #tpu.memory_space<vmem>>, vector<32x32xf32>
    %c48 = arith.constant 48 : index
    %c0_5 = arith.constant 0 : index
    %4 = vector.load %arg1[%c48, %c0_5] : memref<80x96xf32, #tpu.memory_space<vmem>>, vector<32x10xf32>
    %c0_6 = arith.constant 0 : index
    %c0_7 = arith.constant 0 : index
    %5 = vector.load %arg2[%c0_6, %c0_7] : memref<4x64xf32, #tpu.memory_space<vmem>>, vector<1x64xf32>
    %c1 = arith.constant 1 : index
    %c0_8 = arith.constant 0 : index
    %6 = vector.load %arg2[%c1, %c0_8] : memref<4x64xf32, #tpu.memory_space<vmem>>, vector<1x32xf32>
    %c2 = arith.constant 2 : index
    %c0_9 = arith.constant 0 : index
    %7 = vector.load %arg2[%c2, %c0_9] : memref<4x64xf32, #tpu.memory_space<vmem>>, vector<1x32xf32>
    %c3 = arith.constant 3 : index
    %c0_10 = arith.constant 0 : index
    %8 = vector.load %arg2[%c3, %c0_10] : memref<4x64xf32, #tpu.memory_space<vmem>>, vector<1x10xf32>
    %c0_11 = arith.constant 0 : index
    %c0_12 = arith.constant 0 : index
    %9 = vector.load %arg0[%c0_11, %c0_12] : memref<64x16xf32, #tpu.memory_space<vmem>>, vector<64x16xf32>
    %cst = arith.constant dense<0.000000e+00> : vector<64x64xf32>
    %10 = tpu.matmul %9, %0, %cst {dimension_numbers = #tpu.dot_dimension_numbers<[1], [0], [0], [1], [0, 0, 1, 1], [], []>} : vector<64x16xf32>, vector<16x64xf32>, vector<64x64xf32> -> vector<64x64xf32>
    %11 = vector.broadcast %5 : vector<1x64xf32> to vector<64x64xf32>
    %12 = arith.addf %10, %11 : vector<64x64xf32>
    %cst_13 = arith.constant dense<0.000000e+00> : vector<64x32xf32>
    %13 = tpu.matmul %9, %1, %cst_13 {dimension_numbers = #tpu.dot_dimension_numbers<[1], [0], [0], [1], [0, 0, 1, 1], [], []>} : vector<64x16xf32>, vector<16x32xf32>, vector<64x32xf32> -> vector<64x32xf32>
    %14 = vector.broadcast %6 : vector<1x32xf32> to vector<64x32xf32>
    %15 = arith.addf %13, %14 : vector<64x32xf32>
    %cst_14 = arith.constant 0.000000e+00 : f32
    %16 = vector.broadcast %cst_14 : f32 to vector<8x32xf32>
    %17 = vector.extract_strided_slice %12 {offsets = [0, 0], sizes = [8, 64], strides = [1, 1]} : vector<64x64xf32> to vector<8x64xf32>
    %18 = vector.extract_strided_slice %15 {offsets = [0, 0], sizes = [8, 32], strides = [1, 1]} : vector<64x32xf32> to vector<8x32xf32>
    %cst_15 = arith.constant dense<0.000000e+00> : vector<8x64xf32>
    %19 = tpu.matmul %16, %2, %cst_15 {dimension_numbers = #tpu.dot_dimension_numbers<[1], [0], [0], [1], [0, 0, 1, 1], [], []>} : vector<8x32xf32>, vector<32x64xf32>, vector<8x64xf32> -> vector<8x64xf32>
    %cst_16 = arith.constant dense<0.000000e+00> : vector<8x32xf32>
    %20 = tpu.matmul %16, %3, %cst_16 {dimension_numbers = #tpu.dot_dimension_numbers<[1], [0], [0], [1], [0, 0, 1, 1], [], []>} : vector<8x32xf32>, vector<32x32xf32>, vector<8x32xf32> -> vector<8x32xf32>
    %21 = arith.addf %17, %19 : vector<8x64xf32>
    %22 = arith.negf %21 : vector<8x64xf32>
    %23 = math.exp %22 : vector<8x64xf32>
    %cst_17 = arith.constant 1.000000e+00 : f32
    %24 = vector.broadcast %cst_17 : f32 to vector<8x64xf32>
    %25 = arith.addf %24, %23 : vector<8x64xf32>
    %26 = arith.divf %24, %25 : vector<8x64xf32>
    %27 = vector.extract_strided_slice %26 {offsets = [0, 0], sizes = [8, 32], strides = [1, 1]} : vector<8x64xf32> to vector<8x32xf32>
    %28 = vector.extract_strided_slice %26 {offsets = [0, 32], sizes = [8, 32], strides = [1, 1]} : vector<8x64xf32> to vector<8x32xf32>
    %29 = vector.broadcast %7 : vector<1x32xf32> to vector<8x32xf32>
    %30 = arith.addf %20, %29 : vector<8x32xf32>
    %31 = arith.mulf %27, %30 : vector<8x32xf32>
    %32 = arith.addf %18, %31 : vector<8x32xf32>
    %33 = math.tanh %32 : vector<8x32xf32>
    %34 = arith.subf %16, %33 : vector<8x32xf32>
    %35 = arith.mulf %28, %34 : vector<8x32xf32>
    %36 = arith.addf %33, %35 : vector<8x32xf32>
    %37 = vector.extract_strided_slice %36 {offsets = [1, 0], sizes = [1, 32], strides = [1, 1]} : vector<8x32xf32> to vector<1x32xf32>
    %38 = vector.extract_strided_slice %12 {offsets = [8, 0], sizes = [8, 64], strides = [1, 1]} : vector<64x64xf32> to vector<8x64xf32>
    %39 = vector.extract_strided_slice %15 {offsets = [8, 0], sizes = [8, 32], strides = [1, 1]} : vector<64x32xf32> to vector<8x32xf32>
    %cst_18 = arith.constant dense<0.000000e+00> : vector<8x64xf32>
    %40 = tpu.matmul %36, %2, %cst_18 {dimension_numbers = #tpu.dot_dimension_numbers<[1], [0], [0], [1], [0, 0, 1, 1], [], []>} : vector<8x32xf32>, vector<32x64xf32>, vector<8x64xf32> -> vector<8x64xf32>
    %cst_19 = arith.constant dense<0.000000e+00> : vector<8x32xf32>
    %41 = tpu.matmul %36, %3, %cst_19 {dimension_numbers = #tpu.dot_dimension_numbers<[1], [0], [0], [1], [0, 0, 1, 1], [], []>} : vector<8x32xf32>, vector<32x32xf32>, vector<8x32xf32> -> vector<8x32xf32>
    %42 = arith.addf %38, %40 : vector<8x64xf32>
    %43 = arith.negf %42 : vector<8x64xf32>
    %44 = math.exp %43 : vector<8x64xf32>
    %cst_20 = arith.constant 1.000000e+00 : f32
    %45 = vector.broadcast %cst_20 : f32 to vector<8x64xf32>
    %46 = arith.addf %45, %44 : vector<8x64xf32>
    %47 = arith.divf %45, %46 : vector<8x64xf32>
    %48 = vector.extract_strided_slice %47 {offsets = [0, 0], sizes = [8, 32], strides = [1, 1]} : vector<8x64xf32> to vector<8x32xf32>
    %49 = vector.extract_strided_slice %47 {offsets = [0, 32], sizes = [8, 32], strides = [1, 1]} : vector<8x64xf32> to vector<8x32xf32>
    %50 = vector.broadcast %7 : vector<1x32xf32> to vector<8x32xf32>
    %51 = arith.addf %41, %50 : vector<8x32xf32>
    %52 = arith.mulf %48, %51 : vector<8x32xf32>
    %53 = arith.addf %39, %52 : vector<8x32xf32>
    %54 = math.tanh %53 : vector<8x32xf32>
    %55 = arith.subf %36, %54 : vector<8x32xf32>
    %56 = arith.mulf %49, %55 : vector<8x32xf32>
    %57 = arith.addf %54, %56 : vector<8x32xf32>
    %58 = vector.extract_strided_slice %57 {offsets = [1, 0], sizes = [1, 32], strides = [1, 1]} : vector<8x32xf32> to vector<1x32xf32>
    %59 = vector.extract_strided_slice %12 {offsets = [16, 0], sizes = [8, 64], strides = [1, 1]} : vector<64x64xf32> to vector<8x64xf32>
    %60 = vector.extract_strided_slice %15 {offsets = [16, 0], sizes = [8, 32], strides = [1, 1]} : vector<64x32xf32> to vector<8x32xf32>
    %cst_21 = arith.constant dense<0.000000e+00> : vector<8x64xf32>
    %61 = tpu.matmul %57, %2, %cst_21 {dimension_numbers = #tpu.dot_dimension_numbers<[1], [0], [0], [1], [0, 0, 1, 1], [], []>} : vector<8x32xf32>, vector<32x64xf32>, vector<8x64xf32> -> vector<8x64xf32>
    %cst_22 = arith.constant dense<0.000000e+00> : vector<8x32xf32>
    %62 = tpu.matmul %57, %3, %cst_22 {dimension_numbers = #tpu.dot_dimension_numbers<[1], [0], [0], [1], [0, 0, 1, 1], [], []>} : vector<8x32xf32>, vector<32x32xf32>, vector<8x32xf32> -> vector<8x32xf32>
    %63 = arith.addf %59, %61 : vector<8x64xf32>
    %64 = arith.negf %63 : vector<8x64xf32>
    %65 = math.exp %64 : vector<8x64xf32>
    %cst_23 = arith.constant 1.000000e+00 : f32
    %66 = vector.broadcast %cst_23 : f32 to vector<8x64xf32>
    %67 = arith.addf %66, %65 : vector<8x64xf32>
    %68 = arith.divf %66, %67 : vector<8x64xf32>
    %69 = vector.extract_strided_slice %68 {offsets = [0, 0], sizes = [8, 32], strides = [1, 1]} : vector<8x64xf32> to vector<8x32xf32>
    %70 = vector.extract_strided_slice %68 {offsets = [0, 32], sizes = [8, 32], strides = [1, 1]} : vector<8x64xf32> to vector<8x32xf32>
    %71 = vector.broadcast %7 : vector<1x32xf32> to vector<8x32xf32>
    %72 = arith.addf %62, %71 : vector<8x32xf32>
    %73 = arith.mulf %69, %72 : vector<8x32xf32>
    %74 = arith.addf %60, %73 : vector<8x32xf32>
    %75 = math.tanh %74 : vector<8x32xf32>
    %76 = arith.subf %57, %75 : vector<8x32xf32>
    %77 = arith.mulf %70, %76 : vector<8x32xf32>
    %78 = arith.addf %75, %77 : vector<8x32xf32>
    %79 = vector.extract_strided_slice %78 {offsets = [1, 0], sizes = [1, 32], strides = [1, 1]} : vector<8x32xf32> to vector<1x32xf32>
    %80 = vector.extract_strided_slice %12 {offsets = [24, 0], sizes = [8, 64], strides = [1, 1]} : vector<64x64xf32> to vector<8x64xf32>
    %81 = vector.extract_strided_slice %15 {offsets = [24, 0], sizes = [8, 32], strides = [1, 1]} : vector<64x32xf32> to vector<8x32xf32>
    %cst_24 = arith.constant dense<0.000000e+00> : vector<8x64xf32>
    %82 = tpu.matmul %78, %2, %cst_24 {dimension_numbers = #tpu.dot_dimension_numbers<[1], [0], [0], [1], [0, 0, 1, 1], [], []>} : vector<8x32xf32>, vector<32x64xf32>, vector<8x64xf32> -> vector<8x64xf32>
    %cst_25 = arith.constant dense<0.000000e+00> : vector<8x32xf32>
    %83 = tpu.matmul %78, %3, %cst_25 {dimension_numbers = #tpu.dot_dimension_numbers<[1], [0], [0], [1], [0, 0, 1, 1], [], []>} : vector<8x32xf32>, vector<32x32xf32>, vector<8x32xf32> -> vector<8x32xf32>
    %84 = arith.addf %80, %82 : vector<8x64xf32>
    %85 = arith.negf %84 : vector<8x64xf32>
    %86 = math.exp %85 : vector<8x64xf32>
    %cst_26 = arith.constant 1.000000e+00 : f32
    %87 = vector.broadcast %cst_26 : f32 to vector<8x64xf32>
    %88 = arith.addf %87, %86 : vector<8x64xf32>
    %89 = arith.divf %87, %88 : vector<8x64xf32>
    %90 = vector.extract_strided_slice %89 {offsets = [0, 0], sizes = [8, 32], strides = [1, 1]} : vector<8x64xf32> to vector<8x32xf32>
    %91 = vector.extract_strided_slice %89 {offsets = [0, 32], sizes = [8, 32], strides = [1, 1]} : vector<8x64xf32> to vector<8x32xf32>
    %92 = vector.broadcast %7 : vector<1x32xf32> to vector<8x32xf32>
    %93 = arith.addf %83, %92 : vector<8x32xf32>
    %94 = arith.mulf %90, %93 : vector<8x32xf32>
    %95 = arith.addf %81, %94 : vector<8x32xf32>
    %96 = math.tanh %95 : vector<8x32xf32>
    %97 = arith.subf %78, %96 : vector<8x32xf32>
    %98 = arith.mulf %91, %97 : vector<8x32xf32>
    %99 = arith.addf %96, %98 : vector<8x32xf32>
    %100 = vector.extract_strided_slice %99 {offsets = [1, 0], sizes = [1, 32], strides = [1, 1]} : vector<8x32xf32> to vector<1x32xf32>
    %101 = vector.extract_strided_slice %12 {offsets = [32, 0], sizes = [8, 64], strides = [1, 1]} : vector<64x64xf32> to vector<8x64xf32>
    %102 = vector.extract_strided_slice %15 {offsets = [32, 0], sizes = [8, 32], strides = [1, 1]} : vector<64x32xf32> to vector<8x32xf32>
    %cst_27 = arith.constant dense<0.000000e+00> : vector<8x64xf32>
    %103 = tpu.matmul %99, %2, %cst_27 {dimension_numbers = #tpu.dot_dimension_numbers<[1], [0], [0], [1], [0, 0, 1, 1], [], []>} : vector<8x32xf32>, vector<32x64xf32>, vector<8x64xf32> -> vector<8x64xf32>
    %cst_28 = arith.constant dense<0.000000e+00> : vector<8x32xf32>
    %104 = tpu.matmul %99, %3, %cst_28 {dimension_numbers = #tpu.dot_dimension_numbers<[1], [0], [0], [1], [0, 0, 1, 1], [], []>} : vector<8x32xf32>, vector<32x32xf32>, vector<8x32xf32> -> vector<8x32xf32>
    %105 = arith.addf %101, %103 : vector<8x64xf32>
    %106 = arith.negf %105 : vector<8x64xf32>
    %107 = math.exp %106 : vector<8x64xf32>
    %cst_29 = arith.constant 1.000000e+00 : f32
    %108 = vector.broadcast %cst_29 : f32 to vector<8x64xf32>
    %109 = arith.addf %108, %107 : vector<8x64xf32>
    %110 = arith.divf %108, %109 : vector<8x64xf32>
    %111 = vector.extract_strided_slice %110 {offsets = [0, 0], sizes = [8, 32], strides = [1, 1]} : vector<8x64xf32> to vector<8x32xf32>
    %112 = vector.extract_strided_slice %110 {offsets = [0, 32], sizes = [8, 32], strides = [1, 1]} : vector<8x64xf32> to vector<8x32xf32>
    %113 = vector.broadcast %7 : vector<1x32xf32> to vector<8x32xf32>
    %114 = arith.addf %104, %113 : vector<8x32xf32>
    %115 = arith.mulf %111, %114 : vector<8x32xf32>
    %116 = arith.addf %102, %115 : vector<8x32xf32>
    %117 = math.tanh %116 : vector<8x32xf32>
    %118 = arith.subf %99, %117 : vector<8x32xf32>
    %119 = arith.mulf %112, %118 : vector<8x32xf32>
    %120 = arith.addf %117, %119 : vector<8x32xf32>
    %121 = vector.extract_strided_slice %120 {offsets = [1, 0], sizes = [1, 32], strides = [1, 1]} : vector<8x32xf32> to vector<1x32xf32>
    %122 = vector.extract_strided_slice %12 {offsets = [40, 0], sizes = [8, 64], strides = [1, 1]} : vector<64x64xf32> to vector<8x64xf32>
    %123 = vector.extract_strided_slice %15 {offsets = [40, 0], sizes = [8, 32], strides = [1, 1]} : vector<64x32xf32> to vector<8x32xf32>
    %cst_30 = arith.constant dense<0.000000e+00> : vector<8x64xf32>
    %124 = tpu.matmul %120, %2, %cst_30 {dimension_numbers = #tpu.dot_dimension_numbers<[1], [0], [0], [1], [0, 0, 1, 1], [], []>} : vector<8x32xf32>, vector<32x64xf32>, vector<8x64xf32> -> vector<8x64xf32>
    %cst_31 = arith.constant dense<0.000000e+00> : vector<8x32xf32>
    %125 = tpu.matmul %120, %3, %cst_31 {dimension_numbers = #tpu.dot_dimension_numbers<[1], [0], [0], [1], [0, 0, 1, 1], [], []>} : vector<8x32xf32>, vector<32x32xf32>, vector<8x32xf32> -> vector<8x32xf32>
    %126 = arith.addf %122, %124 : vector<8x64xf32>
    %127 = arith.negf %126 : vector<8x64xf32>
    %128 = math.exp %127 : vector<8x64xf32>
    %cst_32 = arith.constant 1.000000e+00 : f32
    %129 = vector.broadcast %cst_32 : f32 to vector<8x64xf32>
    %130 = arith.addf %129, %128 : vector<8x64xf32>
    %131 = arith.divf %129, %130 : vector<8x64xf32>
    %132 = vector.extract_strided_slice %131 {offsets = [0, 0], sizes = [8, 32], strides = [1, 1]} : vector<8x64xf32> to vector<8x32xf32>
    %133 = vector.extract_strided_slice %131 {offsets = [0, 32], sizes = [8, 32], strides = [1, 1]} : vector<8x64xf32> to vector<8x32xf32>
    %134 = vector.broadcast %7 : vector<1x32xf32> to vector<8x32xf32>
    %135 = arith.addf %125, %134 : vector<8x32xf32>
    %136 = arith.mulf %132, %135 : vector<8x32xf32>
    %137 = arith.addf %123, %136 : vector<8x32xf32>
    %138 = math.tanh %137 : vector<8x32xf32>
    %139 = arith.subf %120, %138 : vector<8x32xf32>
    %140 = arith.mulf %133, %139 : vector<8x32xf32>
    %141 = arith.addf %138, %140 : vector<8x32xf32>
    %142 = vector.extract_strided_slice %141 {offsets = [1, 0], sizes = [1, 32], strides = [1, 1]} : vector<8x32xf32> to vector<1x32xf32>
    %143 = vector.extract_strided_slice %12 {offsets = [48, 0], sizes = [8, 64], strides = [1, 1]} : vector<64x64xf32> to vector<8x64xf32>
    %144 = vector.extract_strided_slice %15 {offsets = [48, 0], sizes = [8, 32], strides = [1, 1]} : vector<64x32xf32> to vector<8x32xf32>
    %cst_33 = arith.constant dense<0.000000e+00> : vector<8x64xf32>
    %145 = tpu.matmul %141, %2, %cst_33 {dimension_numbers = #tpu.dot_dimension_numbers<[1], [0], [0], [1], [0, 0, 1, 1], [], []>} : vector<8x32xf32>, vector<32x64xf32>, vector<8x64xf32> -> vector<8x64xf32>
    %cst_34 = arith.constant dense<0.000000e+00> : vector<8x32xf32>
    %146 = tpu.matmul %141, %3, %cst_34 {dimension_numbers = #tpu.dot_dimension_numbers<[1], [0], [0], [1], [0, 0, 1, 1], [], []>} : vector<8x32xf32>, vector<32x32xf32>, vector<8x32xf32> -> vector<8x32xf32>
    %147 = arith.addf %143, %145 : vector<8x64xf32>
    %148 = arith.negf %147 : vector<8x64xf32>
    %149 = math.exp %148 : vector<8x64xf32>
    %cst_35 = arith.constant 1.000000e+00 : f32
    %150 = vector.broadcast %cst_35 : f32 to vector<8x64xf32>
    %151 = arith.addf %150, %149 : vector<8x64xf32>
    %152 = arith.divf %150, %151 : vector<8x64xf32>
    %153 = vector.extract_strided_slice %152 {offsets = [0, 0], sizes = [8, 32], strides = [1, 1]} : vector<8x64xf32> to vector<8x32xf32>
    %154 = vector.extract_strided_slice %152 {offsets = [0, 32], sizes = [8, 32], strides = [1, 1]} : vector<8x64xf32> to vector<8x32xf32>
    %155 = vector.broadcast %7 : vector<1x32xf32> to vector<8x32xf32>
    %156 = arith.addf %146, %155 : vector<8x32xf32>
    %157 = arith.mulf %153, %156 : vector<8x32xf32>
    %158 = arith.addf %144, %157 : vector<8x32xf32>
    %159 = math.tanh %158 : vector<8x32xf32>
    %160 = arith.subf %141, %159 : vector<8x32xf32>
    %161 = arith.mulf %154, %160 : vector<8x32xf32>
    %162 = arith.addf %159, %161 : vector<8x32xf32>
    %163 = vector.extract_strided_slice %162 {offsets = [1, 0], sizes = [1, 32], strides = [1, 1]} : vector<8x32xf32> to vector<1x32xf32>
    %164 = vector.extract_strided_slice %12 {offsets = [56, 0], sizes = [8, 64], strides = [1, 1]} : vector<64x64xf32> to vector<8x64xf32>
    %165 = vector.extract_strided_slice %15 {offsets = [56, 0], sizes = [8, 32], strides = [1, 1]} : vector<64x32xf32> to vector<8x32xf32>
    %cst_36 = arith.constant dense<0.000000e+00> : vector<8x64xf32>
    %166 = tpu.matmul %162, %2, %cst_36 {dimension_numbers = #tpu.dot_dimension_numbers<[1], [0], [0], [1], [0, 0, 1, 1], [], []>} : vector<8x32xf32>, vector<32x64xf32>, vector<8x64xf32> -> vector<8x64xf32>
    %cst_37 = arith.constant dense<0.000000e+00> : vector<8x32xf32>
    %167 = tpu.matmul %162, %3, %cst_37 {dimension_numbers = #tpu.dot_dimension_numbers<[1], [0], [0], [1], [0, 0, 1, 1], [], []>} : vector<8x32xf32>, vector<32x32xf32>, vector<8x32xf32> -> vector<8x32xf32>
    %168 = arith.addf %164, %166 : vector<8x64xf32>
    %169 = arith.negf %168 : vector<8x64xf32>
    %170 = math.exp %169 : vector<8x64xf32>
    %cst_38 = arith.constant 1.000000e+00 : f32
    %171 = vector.broadcast %cst_38 : f32 to vector<8x64xf32>
    %172 = arith.addf %171, %170 : vector<8x64xf32>
    %173 = arith.divf %171, %172 : vector<8x64xf32>
    %174 = vector.extract_strided_slice %173 {offsets = [0, 0], sizes = [8, 32], strides = [1, 1]} : vector<8x64xf32> to vector<8x32xf32>
    %175 = vector.extract_strided_slice %173 {offsets = [0, 32], sizes = [8, 32], strides = [1, 1]} : vector<8x64xf32> to vector<8x32xf32>
    %176 = vector.broadcast %7 : vector<1x32xf32> to vector<8x32xf32>
    %177 = arith.addf %167, %176 : vector<8x32xf32>
    %178 = arith.mulf %174, %177 : vector<8x32xf32>
    %179 = arith.addf %165, %178 : vector<8x32xf32>
    %180 = math.tanh %179 : vector<8x32xf32>
    %181 = arith.subf %162, %180 : vector<8x32xf32>
    %182 = arith.mulf %175, %181 : vector<8x32xf32>
    %183 = arith.addf %180, %182 : vector<8x32xf32>
    %184 = vector.extract_strided_slice %183 {offsets = [1, 0], sizes = [1, 32], strides = [1, 1]} : vector<8x32xf32> to vector<1x32xf32>
    %c0_39 = arith.constant 0 : index
    %c0_40 = arith.constant 0 : index
    %185 = vector.load %arg4[%c0_39, %c0_40] : memref<8x32xf32, #tpu.memory_space<vmem>>, vector<8x32xf32>
    tpu.vector_store %arg4[%c0_39, %c0_40], %183 {strides = array<i32>} : memref<8x32xf32, #tpu.memory_space<vmem>>, vector<8x32xf32>,
    %186 = tpu.concatenate %37, %58, %79, %100, %121, %142, %163, %184 in 0 : vector<1x32xf32>, vector<1x32xf32>, vector<1x32xf32>, vector<1x32xf32>, vector<1x32xf32>, vector<1x32xf32>, vector<1x32xf32>, vector<1x32xf32> -> vector<8x32xf32>
    %cst_41 = arith.constant 0.000000e+00 : f32
    %187 = vector.broadcast %cst_41 : f32 to vector<8x32xf32>
    %188 = arith.maximumf %186, %187 : vector<8x32xf32>
    %cst_42 = arith.constant dense<0.000000e+00> : vector<8x10xf32>
    %189 = tpu.matmul %188, %4, %cst_42 {dimension_numbers = #tpu.dot_dimension_numbers<[1], [0], [0], [1], [0, 0, 1, 1], [], []>} : vector<8x32xf32>, vector<32x10xf32>, vector<8x10xf32> -> vector<8x10xf32>
    %190 = vector.broadcast %8 : vector<1x10xf32> to vector<8x10xf32>
    %191 = arith.addf %189, %190 : vector<8x10xf32>
    %cst_43 = arith.constant dense<0xFF800000> : vector<8xf32>
    %192 = vector.multi_reduction <maximumf>, %191, %cst_43 [1] : vector<8x10xf32> to vector<8xf32>
    %193 = vector.shape_cast %192 : vector<8xf32> to vector<8x1xf32>
    %194 = vector.broadcast %193 : vector<8x1xf32> to vector<8x10xf32>
    %195 = arith.subf %191, %194 : vector<8x10xf32>
    %196 = math.exp %195 : vector<8x10xf32>
    %cst_44 = arith.constant dense<0.000000e+00> : vector<8xf32>
    %197 = vector.multi_reduction <add>, %196, %cst_44 [1] : vector<8x10xf32> to vector<8xf32>
    %198 = vector.shape_cast %197 : vector<8xf32> to vector<8x1xf32>
    %199 = math.log %198 : vector<8x1xf32>
    %200 = vector.broadcast %199 : vector<8x1xf32> to vector<8x10xf32>
    %201 = arith.subf %195, %200 : vector<8x10xf32>
    %c0_45 = arith.constant 0 : index
    %c0_46 = arith.constant 0 : index
    %202 = vector.load %arg3[%c0_45, %c0_46] : memref<8x10xf32, #tpu.memory_space<vmem>>, vector<8x10xf32>
    tpu.vector_store %arg3[%c0_45, %c0_46], %201 {strides = array<i32>} : memref<8x10xf32, #tpu.memory_space<vmem>>, vector<8x10xf32>,
    return
  }
}

</mosaic_0001>

<llo_original>
// kernel: uni_gru_forward.1
$region0: #{uni_gru_forward.1}
  #allocation0 [shape = 'u32[]', space=smem, size = 0x4, offset = 0x4, fixed_abs, tag = 'smem constant byte address 0x4 - core index']
  #allocation1 [shape = 'u32[144,128]{1,0:T(1,128)}', space=vmem, size = 0x12000, scoped, tag = 'internal scratch']
  %s0 = inlined_call_operand.vmem [shape: f32[64,16], index: 0, kind: input, shape index: {}]
  %s1 = inlined_call_operand.vmem [shape: f32[80,96], index: 1, kind: input, shape index: {}]
  %s2 = inlined_call_operand.vmem [shape: f32[4,64], index: 2, kind: input, shape index: {}]
  %s3 = inlined_call_operand.hbm [shape: f32[8,10], index: 3, kind: output, shape index: {0}]
  %s4 = inlined_call_operand.vmem [shape: f32[8,32], index: 4, kind: output, shape index: {1}]
  %5 = xla_tuple %s3, %s4
  %s6 = sld [smem:[#allocation0]]
  $region30: #{uni_gru_forward.1} parent=0
    _
  %s8 = ssub.s32 1, %s6
  %s9 = scalar_select 0, %s8, %s6
  $region1: #{uni_gru_forward.1} parent=0
    #allocation2 [shape = 'u8[4096]{0}', space=vmem, size = 0x1000, scoped, tag = 'output window, operand 0, single buffered']
    #allocation3 [shape = 's32[1]{0}', space=sflag, size = 0x4, scoped, tag = 'scoped memory for uni_gru_forward.1']
    %10 = vsyncpa [#allocation3], 0
    // Predicated region
    $region2: #{uni_gru_forward.1} parent=1 // pred_check
      _
    $region3: #{uni_gru_forward.1} parent=1 // pred_check_branch
      %12 = sbr.rel (0) target = $region5
    $region4: #{uni_gru_forward.1} parent=1 // pred_region
      _
    $region5: #{uni_gru_forward.1} parent=1 // pred_fallthru
      _
    // Predicated region
    $region6: #{uni_gru_forward.1} parent=1 // pred_check
      _
    $region7: #{uni_gru_forward.1} parent=1 // pred_check_branch
      %14 = sbr.rel (0) target = $region9
    $region8: #{uni_gru_forward.1} parent=1 // pred_region
      _
    $region9: #{uni_gru_forward.1} parent=1 // pred_fallthru
      _
    // Predicated region
    $region10: #{uni_gru_forward.1} parent=1 // pred_check
      _
    $region11: #{uni_gru_forward.1} parent=1 // pred_check_branch
      %16 = sbr.rel (0) target = $region13
    $region12: #{uni_gru_forward.1} parent=1 // pred_region
      _
    $region13: #{uni_gru_forward.1} parent=1 // pred_fallthru
      _
    %v17 = vld [vmem:[%s1] sm:$0xff]
    %v18 = vld [vmem:[%s1 + $0x8] sm:$0xff]
    %v19 = vld [vmem:[%s1 + $0x10] sm:$0xff]
    %v20 = vld [vmem:[%s1 + $0x18] sm:$0xff]
    %v21 = vld [vmem:[%s1 + $0x20] sm:$0xff]
    %v22 = vld [vmem:[%s1 + $0x28] sm:$0xff]
    %v23 = vld [vmem:[%s1 + $0x30] sm:$0xff]
    %v24 = vld [vmem:[%s1 + $0x38] sm:$0xff]
    %v25 = vld [vmem:[%s1 + $0x40] sm:$0xff]
    %v26 = vld [vmem:[%s1 + $0x48] sm:$0xff]
    %v27 = vld [vmem:[%s2] sm:$0x1]
    %v28 = vld [vmem:[%s2 + $0x1] sm:$0x1]
    %v29 = vld [vmem:[%s2 + $0x2] sm:$0x1]
    %v30 = vld [vmem:[%s2 + $0x3] sm:$0x1]
    %v31 = vld [vmem:[%s0] sm:$0xff]
    %v32 = vld [vmem:[%s0 + $0x8] sm:$0xff]
    %v33 = vld [vmem:[%s0 + $0x10] sm:$0xff]
    %v34 = vld [vmem:[%s0 + $0x18] sm:$0xff]
    %v35 = vld [vmem:[%s0 + $0x20] sm:$0xff]
    %v36 = vld [vmem:[%s0 + $0x28] sm:$0xff]
    %v37 = vld [vmem:[%s0 + $0x30] sm:$0xff]
    %v38 = vld [vmem:[%s0 + $0x38] sm:$0xff]
    %v39 = vlaneseq
    %v40 = vshrl.u32 %v39, 7
    %v41 = vsub.s32 0, %v40
    %v42 = vrot.slane %v27, %v41
    %vm43 = vcmask 130048
    %v45 = vsel %vm43, %v31, 0
    %v48 = vsel %vm43, %v32, 0
    %v51 = vsel %vm43, %v33, 0
    %v54 = vsel %vm43, %v34, 0
    %v57 = vsel %vm43, %v35, 0
    %v60 = vsel %vm43, %v36, 0
    %v63 = vsel %vm43, %v37, 0
    %v66 = vsel %vm43, %v38, 0
    %68 = vmatprep.subr.mxu0 0.0
    %69 = vmatpush1.msra.mxu0 0.0
    %70 = vmatprep.subr.mxu0 0.0
    %71 = vmatpush1.msra.mxu0 0.0
    %72 = vmatprep.subr.mxu0 0.0
    %73 = vmatpush1.msra.mxu0 0.0
    %74 = vmatprep.subr.mxu0 0.0
    %75 = vmatpush1.msra.mxu0 0.0
    %76 = vmatprep.subr.mxu0 0.0
    %77 = vmatpush1.msra.mxu0 0.0
    %78 = vmatprep.subr.mxu0 0.0
    %79 = vmatpush1.msra.mxu0 0.0
    %80 = vmatprep.subr.mxu0 0.0
    %81 = vmatpush1.msra.mxu0 0.0
    %82 = vmatprep.subr.mxu0 0.0
    %83 = vmatpush1.msra.mxu0 0.0
    %84 = vmatprep.subr.mxu0 0.0
    %85 = vmatpush1.msra.mxu0 0.0
    %86 = vmatprep.subr.mxu0 0.0
    %87 = vmatpush1.msra.mxu0 0.0
    %88 = vmatprep.subr.mxu0 0.0
    %89 = vmatpush1.msra.mxu0 0.0
    %90 = vmatprep.subr.mxu0 0.0
    %91 = vmatpush1.msra.mxu0 0.0
    %92 = vmatprep.subr.mxu0 0.0
    %93 = vmatpush1.msra.mxu0 0.0
    %94 = vmatprep.subr.mxu0 0.0
    %95 = vmatpush1.msra.mxu0 0.0
    %96 = vmatprep.subr.mxu0 0.0
    %97 = vmatpush1.msra.mxu0 %v18
    %98 = vmatprep.subr.mxu0 0.0
    %99 = vmatpush1.msra.mxu0 %v17
    %100 = vmatprep.subr.mxu0 0.0
    %101 = vmatpush2.msra.mxu0 0.0
    %102 = vmatprep.subr.mxu0 0.0
    %103 = vmatpush2.msra.mxu0 0.0
    %104 = vmatprep.subr.mxu0 0.0
    %105 = vmatpush2.msra.mxu0 0.0
    %106 = vmatprep.subr.mxu0 0.0
    %107 = vmatpush2.msra.mxu0 0.0
    %108 = vmatprep.subr.mxu0 0.0
    %109 = vmatpush2.msra.mxu0 0.0
    %110 = vmatprep.subr.mxu0 0.0
    %111 = vmatpush2.msra.mxu0 0.0
    %112 = vmatprep.subr.mxu0 0.0
    %113 = vmatpush2.msra.mxu0 0.0
    %114 = vmatprep.subr.mxu0 0.0
    %115 = vmatpush2.msra.mxu0 0.0
    %116 = vmatprep.subr.mxu0 0.0
    %117 = vmatpush2.msra.mxu0 0.0
    %118 = vmatprep.subr.mxu0 0.0
    %119 = vmatpush2.msra.mxu0 0.0
    %120 = vmatprep.subr.mxu0 0.0
    %121 = vmatpush2.msra.mxu0 0.0
    %122 = vmatprep.subr.mxu0 0.0
    %123 = vmatpush2.msra.mxu0 0.0
    %124 = vmatprep.subr.mxu0 0.0
    %125 = vmatpush2.msra.mxu0 0.0
    %126 = vmatprep.subr.mxu0 0.0
    %127 = vmatpush2.msra.mxu0 0.0
    %128 = vmatprep.subr.mxu0 0.0
    %129 = vmatpush2.msra.mxu0 0.0
    %130 = vmatprep.subr.mxu0 0.0
    %131 = vmatpush2.msra.mxu0 0.0
    %132 = vmatprep.mubr.f32.mxu0 0.0
    %133 = vmatmul.mubr.f32.gmra.mxu0 %v45
    %v134 = vpop.f32.mrf.mxu0
    %v135 = vadd.f32 %v42, %v134
    %v136 = vpop.f32.mrf.mxu0
    %137 = vmatprep.mubr.f32.mxu0 0.0
    %138 = vmatmul.mubr.f32.gmra.mxu0 %v48
    %v139 = vpop.f32.mrf.mxu0
    %v140 = vadd.f32 %v42, %v139
    %v141 = vpop.f32.mrf.mxu0
    %142 = vmatprep.mubr.f32.mxu0 0.0
    %143 = vmatmul.mubr.f32.gmra.mxu0 %v51
    %v144 = vpop.f32.mrf.mxu0
    %v145 = vadd.f32 %v42, %v144
    %v146 = vpop.f32.mrf.mxu0
    %147 = vmatprep.mubr.f32.mxu0 0.0
    %148 = vmatmul.mubr.f32.gmra.mxu0 %v54
    %v149 = vpop.f32.mrf.mxu0
    %v150 = vadd.f32 %v42, %v149
    %v151 = vpop.f32.mrf.mxu0
    %152 = vmatprep.mubr.f32.mxu0 0.0
    %153 = vmatmul.mubr.f32.gmra.mxu0 %v57
    %v154 = vpop.f32.mrf.mxu0
    %v155 = vadd.f32 %v42, %v154
    %v156 = vpop.f32.mrf.mxu0
    %157 = vmatprep.mubr.f32.mxu0 0.0
    %158 = vmatmul.mubr.f32.gmra.mxu0 %v60
    %v159 = vpop.f32.mrf.mxu0
    %v160 = vadd.f32 %v42, %v159
    %v161 = vpop.f32.mrf.mxu0
    %162 = vmatprep.mubr.f32.mxu0 0.0
    %163 = vmatmul.mubr.f32.gmra.mxu0 %v63
    %v164 = vpop.f32.mrf.mxu0
    %v165 = vadd.f32 %v42, %v164
    %v166 = vpop.f32.mrf.mxu0
    %167 = vmatprep.mubr.f32.mxu0 0.0
    %168 = vmatmul.mubr.f32.gmra.mxu0 %v66
    %v169 = vpop.f32.mrf.mxu0
    %v170 = vadd.f32 %v42, %v169
    %v171 = vpop.f32.mrf.mxu0
    %172 = vdwg.mxu0
    %v173 = vlaneseq
    %v174 = vshrl.u32 %v173, 7
    %v175 = vsub.s32 0, %v174
    %v176 = vrot.slane %v28, %v175
    %179 = vrot.lane.b32.xlu0 %v17, 64
    %v180 = vpop.permute.xlu0 %179
    %181 = vrot.lane.b32.xlu0 %v18, 64
    %v182 = vpop.permute.xlu0 %181
    %185 = vmatprep.subr.mxu0 0.0
    %186 = vmatpush1.msra.mxu0 0.0
    %187 = vmatprep.subr.mxu0 0.0
    %188 = vmatpush1.msra.mxu0 0.0
    %189 = vmatprep.subr.mxu0 0.0
    %190 = vmatpush1.msra.mxu0 0.0
    %191 = vmatprep.subr.mxu0 0.0
    %192 = vmatpush1.msra.mxu0 0.0
    %193 = vmatprep.subr.mxu0 0.0
    %194 = vmatpush1.msra.mxu0 0.0
    %195 = vmatprep.subr.mxu0 0.0
    %196 = vmatpush1.msra.mxu0 0.0
    %197 = vmatprep.subr.mxu0 0.0
    %198 = vmatpush1.msra.mxu0 0.0
    %199 = vmatprep.subr.mxu0 0.0
    %200 = vmatpush1.msra.mxu0 0.0
    %201 = vmatprep.subr.mxu0 0.0
    %202 = vmatpush1.msra.mxu0 0.0
    %203 = vmatprep.subr.mxu0 0.0
    %204 = vmatpush1.msra.mxu0 0.0
    %205 = vmatprep.subr.mxu0 0.0
    %206 = vmatpush1.msra.mxu0 0.0
    %207 = vmatprep.subr.mxu0 0.0
    %208 = vmatpush1.msra.mxu0 0.0
    %209 = vmatprep.subr.mxu0 0.0
    %210 = vmatpush1.msra.mxu0 0.0
    %211 = vmatprep.subr.mxu0 0.0
    %212 = vmatpush1.msra.mxu0 0.0
    %213 = vmatprep.subr.mxu0 0.0
    %214 = vmatpush1.msra.mxu0 %v182
    %215 = vmatprep.subr.mxu0 0.0
    %216 = vmatpush1.msra.mxu0 %v180
    %217 = vmatprep.subr.mxu0 0.0
    %218 = vmatpush2.msra.mxu0 0.0
    %219 = vmatprep.subr.mxu0 0.0
    %220 = vmatpush2.msra.mxu0 0.0
    %221 = vmatprep.subr.mxu0 0.0
    %222 = vmatpush2.msra.mxu0 0.0
    %223 = vmatprep.subr.mxu0 0.0
    %224 = vmatpush2.msra.mxu0 0.0
    %225 = vmatprep.subr.mxu0 0.0
    %226 = vmatpush2.msra.mxu0 0.0
    %227 = vmatprep.subr.mxu0 0.0
    %228 = vmatpush2.msra.mxu0 0.0
    %229 = vmatprep.subr.mxu0 0.0
    %230 = vmatpush2.msra.mxu0 0.0
    %231 = vmatprep.subr.mxu0 0.0
    %232 = vmatpush2.msra.mxu0 0.0
    %233 = vmatprep.subr.mxu0 0.0
    %234 = vmatpush2.msra.mxu0 0.0
    %235 = vmatprep.subr.mxu0 0.0
    %236 = vmatpush2.msra.mxu0 0.0
    %237 = vmatprep.subr.mxu0 0.0
    %238 = vmatpush2.msra.mxu0 0.0
    %239 = vmatprep.subr.mxu0 0.0
    %240 = vmatpush2.msra.mxu0 0.0
    %241 = vmatprep.subr.mxu0 0.0
    %242 = vmatpush2.msra.mxu0 0.0
    %243 = vmatprep.subr.mxu0 0.0
    %244 = vmatpush2.msra.mxu0 0.0
    %245 = vmatprep.subr.mxu0 0.0
    %246 = vmatpush2.msra.mxu0 0.0
    %247 = vmatprep.subr.mxu0 0.0
    %248 = vmatpush2.msra.mxu0 0.0
    %249 = vmatprep.mubr.f32.mxu0 0.0
    %250 = vmatmul.mubr.f32.gmra.mxu0 %v45
    %v251 = vpop.f32.mrf.mxu0
    %v252 = vadd.f32 %v176, %v251
    %v253 = vpop.f32.mrf.mxu0
    %254 = vmatprep.mubr.f32.mxu0 0.0
    %255 = vmatmul.mubr.f32.gmra.mxu0 %v48
    %v256 = vpop.f32.mrf.mxu0
    %v257 = vadd.f32 %v176, %v256
    %v258 = vpop.f32.mrf.mxu0
    %259 = vmatprep.mubr.f32.mxu0 0.0
    %260 = vmatmul.mubr.f32.gmra.mxu0 %v51
    %v261 = vpop.f32.mrf.mxu0
    %v262 = vadd.f32 %v176, %v261
    %v263 = vpop.f32.mrf.mxu0
    %264 = vmatprep.mubr.f32.mxu0 0.0
    %265 = vmatmul.mubr.f32.gmra.mxu0 %v54
    %v266 = vpop.f32.mrf.mxu0
    %v267 = vadd.f32 %v176, %v266
    %v268 = vpop.f32.mrf.mxu0
    %269 = vmatprep.mubr.f32.mxu0 0.0
    %270 = vmatmul.mubr.f32.gmra.mxu0 %v57
    %v271 = vpop.f32.mrf.mxu0
    %v272 = vadd.f32 %v176, %v271
    %v273 = vpop.f32.mrf.mxu0
    %274 = vmatprep.mubr.f32.mxu0 0.0
    %275 = vmatmul.mubr.f32.gmra.mxu0 %v60
    %v276 = vpop.f32.mrf.mxu0
    %v277 = vadd.f32 %v176, %v276
    %v278 = vpop.f32.mrf.mxu0
    %279 = vmatprep.mubr.f32.mxu0 0.0
    %280 = vmatmul.mubr.f32.gmra.mxu0 %v63
    %v281 = vpop.f32.mrf.mxu0
    %v282 = vadd.f32 %v176, %v281
    %v283 = vpop.f32.mrf.mxu0
    %284 = vmatprep.mubr.f32.mxu0 0.0
    %285 = vmatmul.mubr.f32.gmra.mxu0 %v66
    %v286 = vpop.f32.mrf.mxu0
    %v287 = vadd.f32 %v176, %v286
    %v288 = vpop.f32.mrf.mxu0
    %289 = vdwg.mxu0
    %vm290 = vcmask 261120
    %v292 = vsel %vm290, 0.0, 0
    %294 = vmatprep.subr.mxu0 0.0
    %295 = vmatpush1.msra.mxu0 0.0
    %296 = vmatprep.subr.mxu0 0.0
    %297 = vmatpush1.msra.mxu0 0.0
    %298 = vmatprep.subr.mxu0 0.0
    %299 = vmatpush1.msra.mxu0 0.0
    %300 = vmatprep.subr.mxu0 0.0
    %301 = vmatpush1.msra.mxu0 0.0
    %302 = vmatprep.subr.mxu0 0.0
    %303 = vmatpush1.msra.mxu0 0.0
    %304 = vmatprep.subr.mxu0 0.0
    %305 = vmatpush1.msra.mxu0 0.0
    %306 = vmatprep.subr.mxu0 0.0
    %307 = vmatpush1.msra.mxu0 0.0
    %308 = vmatprep.subr.mxu0 0.0
    %309 = vmatpush1.msra.mxu0 0.0
    %310 = vmatprep.subr.mxu0 0.0
    %311 = vmatpush1.msra.mxu0 0.0
    %312 = vmatprep.subr.mxu0 0.0
    %313 = vmatpush1.msra.mxu0 0.0
    %314 = vmatprep.subr.mxu0 0.0
    %315 = vmatpush1.msra.mxu0 0.0
    %316 = vmatprep.subr.mxu0 0.0
    %317 = vmatpush1.msra.mxu0 0.0
    %318 = vmatprep.subr.mxu0 0.0
    %319 = vmatpush1.msra.mxu0 %v22
    %320 = vmatprep.subr.mxu0 0.0
    %321 = vmatpush1.msra.mxu0 %v21
    %322 = vmatprep.subr.mxu0 0.0
    %323 = vmatpush1.msra.mxu0 %v20
    %324 = vmatprep.subr.mxu0 0.0
    %325 = vmatpush1.msra.mxu0 %v19
    %326 = vmatprep.subr.mxu0 0.0
    %327 = vmatpush2.msra.mxu0 0.0
    %328 = vmatprep.subr.mxu0 0.0
    %329 = vmatpush2.msra.mxu0 0.0
    %330 = vmatprep.subr.mxu0 0.0
    %331 = vmatpush2.msra.mxu0 0.0
    %332 = vmatprep.subr.mxu0 0.0
    %333 = vmatpush2.msra.mxu0 0.0
    %334 = vmatprep.subr.mxu0 0.0
    %335 = vmatpush2.msra.mxu0 0.0
    %336 = vmatprep.subr.mxu0 0.0
    %337 = vmatpush2.msra.mxu0 0.0
    %338 = vmatprep.subr.mxu0 0.0
    %339 = vmatpush2.msra.mxu0 0.0
    %340 = vmatprep.subr.mxu0 0.0
    %341 = vmatpush2.msra.mxu0 0.0
    %342 = vmatprep.subr.mxu0 0.0
    %343 = vmatpush2.msra.mxu0 0.0
    %344 = vmatprep.subr.mxu0 0.0
    %345 = vmatpush2.msra.mxu0 0.0
    %346 = vmatprep.subr.mxu0 0.0
    %347 = vmatpush2.msra.mxu0 0.0
    %348 = vmatprep.subr.mxu0 0.0
    %349 = vmatpush2.msra.mxu0 0.0
    %350 = vmatprep.subr.mxu0 0.0
    %351 = vmatpush2.msra.mxu0 0.0
    %352 = vmatprep.subr.mxu0 0.0
    %353 = vmatpush2.msra.mxu0 0.0
    %354 = vmatprep.subr.mxu0 0.0
    %355 = vmatpush2.msra.mxu0 0.0
    %356 = vmatprep.subr.mxu0 0.0
    %357 = vmatpush2.msra.mxu0 0.0
    %358 = vmatprep.mubr.f32.mxu0 0.0
    %359 = vmatmul.mubr.f32.gmra.mxu0 %v292
    %v360 = vpop.f32.mrf.mxu0
    %v361 = vadd.f32 0.0, %v360
    %v362 = vpop.f32.mrf.mxu0
    %363 = vdwg.mxu0
    %v364 = vadd.f32 %v135, %v361
    %v365 = vxor.u32 %v364, 2147483648
    %v366 = vmul.f32 %v365, 1.442695
    %v367 = vpow.pop %v366
    %v368 = vadd.f32 %v367, 1.0
    %v369 = vrcp.pop %v368
    %v370 = vmul.f32 1.0, %v369
    %v371 = vlaneseq
    %v372 = vshrl.u32 %v371, 7
    %v373 = vsub.s32 0, %v372
    %v374 = vrot.slane %v29, %v373
    %379 = vrot.lane.b32.xlu0 %v19, 64
    %v380 = vpop.permute.xlu0 %379
    %381 = vrot.lane.b32.xlu0 %v20, 64
    %v382 = vpop.permute.xlu0 %381
    %383 = vrot.lane.b32.xlu0 %v21, 64
    %v384 = vpop.permute.xlu0 %383
    %385 = vrot.lane.b32.xlu0 %v22, 64
    %v386 = vpop.permute.xlu0 %385
    %391 = vmatprep.subr.mxu0 0.0
    %392 = vmatpush1.msra.mxu0 0.0
    %393 = vmatprep.subr.mxu0 0.0
    %394 = vmatpush1.msra.mxu0 0.0
    %395 = vmatprep.subr.mxu0 0.0
    %396 = vmatpush1.msra.mxu0 0.0
    %397 = vmatprep.subr.mxu0 0.0
    %398 = vmatpush1.msra.mxu0 0.0
    %399 = vmatprep.subr.mxu0 0.0
    %400 = vmatpush1.msra.mxu0 0.0
    %401 = vmatprep.subr.mxu0 0.0
    %402 = vmatpush1.msra.mxu0 0.0
    %403 = vmatprep.subr.mxu0 0.0
    %404 = vmatpush1.msra.mxu0 0.0
    %405 = vmatprep.subr.mxu0 0.0
    %406 = vmatpush1.msra.mxu0 0.0
    %407 = vmatprep.subr.mxu0 0.0
    %408 = vmatpush1.msra.mxu0 0.0
    %409 = vmatprep.subr.mxu0 0.0
    %410 = vmatpush1.msra.mxu0 0.0
    %411 = vmatprep.subr.mxu0 0.0
    %412 = vmatpush1.msra.mxu0 0.0
    %413 = vmatprep.subr.mxu0 0.0
    %414 = vmatpush1.msra.mxu0 0.0
    %415 = vmatprep.subr.mxu0 0.0
    %416 = vmatpush1.msra.mxu0 %v386
    %417 = vmatprep.subr.mxu0 0.0
    %418 = vmatpush1.msra.mxu0 %v384
    %419 = vmatprep.subr.mxu0 0.0
    %420 = vmatpush1.msra.mxu0 %v382
    %421 = vmatprep.subr.mxu0 0.0
    %422 = vmatpush1.msra.mxu0 %v380
    %423 = vmatprep.subr.mxu0 0.0
    %424 = vmatpush2.msra.mxu0 0.0
    %425 = vmatprep.subr.mxu0 0.0
    %426 = vmatpush2.msra.mxu0 0.0
    %427 = vmatprep.subr.mxu0 0.0
    %428 = vmatpush2.msra.mxu0 0.0
    %429 = vmatprep.subr.mxu0 0.0
    %430 = vmatpush2.msra.mxu0 0.0
    %431 = vmatprep.subr.mxu0 0.0
    %432 = vmatpush2.msra.mxu0 0.0
    %433 = vmatprep.subr.mxu0 0.0
    %434 = vmatpush2.msra.mxu0 0.0
    %435 = vmatprep.subr.mxu0 0.0
    %436 = vmatpush2.msra.mxu0 0.0
    %437 = vmatprep.subr.mxu0 0.0
    %438 = vmatpush2.msra.mxu0 0.0
    %439 = vmatprep.subr.mxu0 0.0
    %440 = vmatpush2.msra.mxu0 0.0
    %441 = vmatprep.subr.mxu0 0.0
    %442 = vmatpush2.msra.mxu0 0.0
    %443 = vmatprep.subr.mxu0 0.0
    %444 = vmatpush2.msra.mxu0 0.0
    %445 = vmatprep.subr.mxu0 0.0
    %446 = vmatpush2.msra.mxu0 0.0
    %447 = vmatprep.subr.mxu0 0.0
    %448 = vmatpush2.msra.mxu0 0.0
    %449 = vmatprep.subr.mxu0 0.0
    %450 = vmatpush2.msra.mxu0 0.0
    %451 = vmatprep.subr.mxu0 0.0
    %452 = vmatpush2.msra.mxu0 0.0
    %453 = vmatprep.subr.mxu0 0.0
    %454 = vmatpush2.msra.mxu0 0.0
    %455 = vmatprep.mubr.f32.mxu0 0.0
    %456 = vmatmul.mubr.f32.gmra.mxu0 %v292
    %v457 = vpop.f32.mrf.mxu0
    %v458 = vadd.f32 %v374, %v457
    %v459 = vpop.f32.mrf.mxu0
    %460 = vdwg.mxu0
    %v461 = vmul.f32 %v370, %v458
    %v462 = vadd.f32 %v252, %v461
    %v463 = vtanh.pop %v462
    %v464 = vsub.f32 0.0, %v463
    %466 = vrot.lane.b32.xlu0 %v464, 32
    %v467 = vpop.permute.xlu0 %466
    %v469 = vmul.f32 %v370, %v467
    %471 = vrot.lane.b32.xlu0 %v469, 96
    %v472 = vpop.permute.xlu0 %471
    %v474 = vadd.f32 %v463, %v472
    %v476 = vsel %vm290, %v474, 0
    %478 = vmatprep.subr.mxu0 0.0
    %479 = vmatpush1.msra.mxu0 0.0
    %480 = vmatprep.subr.mxu0 0.0
    %481 = vmatpush1.msra.mxu0 0.0
    %482 = vmatprep.subr.mxu0 0.0
    %483 = vmatpush1.msra.mxu0 0.0
    %484 = vmatprep.subr.mxu0 0.0
    %485 = vmatpush1.msra.mxu0 0.0
    %486 = vmatprep.subr.mxu0 0.0
    %487 = vmatpush1.msra.mxu0 0.0
    %488 = vmatprep.subr.mxu0 0.0
    %489 = vmatpush1.msra.mxu0 0.0
    %490 = vmatprep.subr.mxu0 0.0
    %491 = vmatpush1.msra.mxu0 0.0
    %492 = vmatprep.subr.mxu0 0.0
    %493 = vmatpush1.msra.mxu0 0.0
    %494 = vmatprep.subr.mxu0 0.0
    %495 = vmatpush1.msra.mxu0 0.0
    %496 = vmatprep.subr.mxu0 0.0
    %497 = vmatpush1.msra.mxu0 0.0
    %498 = vmatprep.subr.mxu0 0.0
    %499 = vmatpush1.msra.mxu0 0.0
    %500 = vmatprep.subr.mxu0 0.0
    %501 = vmatpush1.msra.mxu0 0.0
    %502 = vmatprep.subr.mxu0 0.0
    %503 = vmatpush1.msra.mxu0 %v22
    %504 = vmatprep.subr.mxu0 0.0
    %505 = vmatpush1.msra.mxu0 %v21
    %506 = vmatprep.subr.mxu0 0.0
    %507 = vmatpush1.msra.mxu0 %v20
    %508 = vmatprep.subr.mxu0 0.0
    %509 = vmatpush1.msra.mxu0 %v19
    %510 = vmatprep.subr.mxu0 0.0
    %511 = vmatpush2.msra.mxu0 0.0
    %512 = vmatprep.subr.mxu0 0.0
    %513 = vmatpush2.msra.mxu0 0.0
    %514 = vmatprep.subr.mxu0 0.0
    %515 = vmatpush2.msra.mxu0 0.0
    %516 = vmatprep.subr.mxu0 0.0
    %517 = vmatpush2.msra.mxu0 0.0
    %518 = vmatprep.subr.mxu0 0.0
    %519 = vmatpush2.msra.mxu0 0.0
    %520 = vmatprep.subr.mxu0 0.0
    %521 = vmatpush2.msra.mxu0 0.0
    %522 = vmatprep.subr.mxu0 0.0
    %523 = vmatpush2.msra.mxu0 0.0
    %524 = vmatprep.subr.mxu0 0.0
    %525 = vmatpush2.msra.mxu0 0.0
    %526 = vmatprep.subr.mxu0 0.0
    %527 = vmatpush2.msra.mxu0 0.0
    %528 = vmatprep.subr.mxu0 0.0
    %529 = vmatpush2.msra.mxu0 0.0
    %530 = vmatprep.subr.mxu0 0.0
    %531 = vmatpush2.msra.mxu0 0.0
    %532 = vmatprep.subr.mxu0 0.0
    %533 = vmatpush2.msra.mxu0 0.0
    %534 = vmatprep.subr.mxu0 0.0
    %535 = vmatpush2.msra.mxu0 0.0
    %536 = vmatprep.subr.mxu0 0.0
    %537 = vmatpush2.msra.mxu0 0.0
    %538 = vmatprep.subr.mxu0 0.0
    %539 = vmatpush2.msra.mxu0 0.0
    %540 = vmatprep.subr.mxu0 0.0
    %541 = vmatpush2.msra.mxu0 0.0
    %542 = vmatprep.mubr.f32.mxu0 0.0
    %543 = vmatmul.mubr.f32.gmra.mxu0 %v476
    %v544 = vpop.f32.mrf.mxu0
    %v545 = vadd.f32 0.0, %v544
    %v546 = vpop.f32.mrf.mxu0
    %547 = vdwg.mxu0
    %v548 = vadd.f32 %v140, %v545
    %v549 = vxor.u32 %v548, 2147483648
    %v550 = vmul.f32 %v549, 1.442695
    %v551 = vpow.pop %v550
    %v552 = vadd.f32 %v551, 1.0
    %v553 = vrcp.pop %v552
    %v554 = vmul.f32 1.0, %v553
    %555 = vmatprep.subr.mxu0 0.0
    %556 = vmatpush1.msra.mxu0 0.0
    %557 = vmatprep.subr.mxu0 0.0
    %558 = vmatpush1.msra.mxu0 0.0
    %559 = vmatprep.subr.mxu0 0.0
    %560 = vmatpush1.msra.mxu0 0.0
    %561 = vmatprep.subr.mxu0 0.0
    %562 = vmatpush1.msra.mxu0 0.0
    %563 = vmatprep.subr.mxu0 0.0
    %564 = vmatpush1.msra.mxu0 0.0
    %565 = vmatprep.subr.mxu0 0.0
    %566 = vmatpush1.msra.mxu0 0.0
    %567 = vmatprep.subr.mxu0 0.0
    %568 = vmatpush1.msra.mxu0 0.0
    %569 = vmatprep.subr.mxu0 0.0
    %570 = vmatpush1.msra.mxu0 0.0
    %571 = vmatprep.subr.mxu0 0.0
    %572 = vmatpush1.msra.mxu0 0.0
    %573 = vmatprep.subr.mxu0 0.0
    %574 = vmatpush1.msra.mxu0 0.0
    %575 = vmatprep.subr.mxu0 0.0
    %576 = vmatpush1.msra.mxu0 0.0
    %577 = vmatprep.subr.mxu0 0.0
    %578 = vmatpush1.msra.mxu0 0.0
    %579 = vmatprep.subr.mxu0 0.0
    %580 = vmatpush1.msra.mxu0 %v386
    %581 = vmatprep.subr.mxu0 0.0
    %582 = vmatpush1.msra.mxu0 %v384
    %583 = vmatprep.subr.mxu0 0.0
    %584 = vmatpush1.msra.mxu0 %v382
    %585 = vmatprep.subr.mxu0 0.0
    %586 = vmatpush1.msra.mxu0 %v380
    %587 = vmatprep.subr.mxu0 0.0
    %588 = vmatpush2.msra.mxu0 0.0
    %589 = vmatprep.subr.mxu0 0.0
    %590 = vmatpush2.msra.mxu0 0.0
    %591 = vmatprep.subr.mxu0 0.0
    %592 = vmatpush2.msra.mxu0 0.0
    %593 = vmatprep.subr.mxu0 0.0
    %594 = vmatpush2.msra.mxu0 0.0
    %595 = vmatprep.subr.mxu0 0.0
    %596 = vmatpush2.msra.mxu0 0.0
    %597 = vmatprep.subr.mxu0 0.0
    %598 = vmatpush2.msra.mxu0 0.0
    %599 = vmatprep.subr.mxu0 0.0
    %600 = vmatpush2.msra.mxu0 0.0
    %601 = vmatprep.subr.mxu0 0.0
    %602 = vmatpush2.msra.mxu0 0.0
    %603 = vmatprep.subr.mxu0 0.0
    %604 = vmatpush2.msra.mxu0 0.0
    %605 = vmatprep.subr.mxu0 0.0
    %606 = vmatpush2.msra.mxu0 0.0
    %607 = vmatprep.subr.mxu0 0.0
    %608 = vmatpush2.msra.mxu0 0.0
    %609 = vmatprep.subr.mxu0 0.0
    %610 = vmatpush2.msra.mxu0 0.0
    %611 = vmatprep.subr.mxu0 0.0
    %612 = vmatpush2.msra.mxu0 0.0
    %613 = vmatprep.subr.mxu0 0.0
    %614 = vmatpush2.msra.mxu0 0.0
    %615 = vmatprep.subr.mxu0 0.0
    %616 = vmatpush2.msra.mxu0 0.0
    %617 = vmatprep.subr.mxu0 0.0
    %618 = vmatpush2.msra.mxu0 0.0
    %619 = vmatprep.mubr.f32.mxu0 0.0
    %620 = vmatmul.mubr.f32.gmra.mxu0 %v476
    %v621 = vpop.f32.mrf.mxu0
    %v622 = vadd.f32 %v374, %v621
    %v623 = vpop.f32.mrf.mxu0
    %624 = vdwg.mxu0
    %v625 = vmul.f32 %v554, %v622
    %v626 = vadd.f32 %v257, %v625
    %v627 = vtanh.pop %v626
    %v628 = vsub.f32 %v474, %v627
    %630 = vrot.lane.b32.xlu0 %v628, 32
    %v631 = vpop.permute.xlu0 %630
    %v633 = vmul.f32 %v554, %v631
    %635 = vrot.lane.b32.xlu0 %v633, 96
    %v636 = vpop.permute.xlu0 %635
    %v638 = vadd.f32 %v627, %v636
    %v640 = vsel %vm290, %v638, 0
    %642 = vmatprep.subr.mxu0 0.0
    %643 = vmatpush1.msra.mxu0 0.0
    %644 = vmatprep.subr.mxu0 0.0
    %645 = vmatpush1.msra.mxu0 0.0
    %646 = vmatprep.subr.mxu0 0.0
    %647 = vmatpush1.msra.mxu0 0.0
    %648 = vmatprep.subr.mxu0 0.0
    %649 = vmatpush1.msra.mxu0 0.0
    %650 = vmatprep.subr.mxu0 0.0
    %651 = vmatpush1.msra.mxu0 0.0
    %652 = vmatprep.subr.mxu0 0.0
    %653 = vmatpush1.msra.mxu0 0.0
    %654 = vmatprep.subr.mxu0 0.0
    %655 = vmatpush1.msra.mxu0 0.0
    %656 = vmatprep.subr.mxu0 0.0
    %657 = vmatpush1.msra.mxu0 0.0
    %658 = vmatprep.subr.mxu0 0.0
    %659 = vmatpush1.msra.mxu0 0.0
    %660 = vmatprep.subr.mxu0 0.0
    %661 = vmatpush1.msra.mxu0 0.0
    %662 = vmatprep.subr.mxu0 0.0
    %663 = vmatpush1.msra.mxu0 0.0
    %664 = vmatprep.subr.mxu0 0.0
    %665 = vmatpush1.msra.mxu0 0.0
    %666 = vmatprep.subr.mxu0 0.0
    %667 = vmatpush1.msra.mxu0 %v22
    %668 = vmatprep.subr.mxu0 0.0
    %669 = vmatpush1.msra.mxu0 %v21
    %670 = vmatprep.subr.mxu0 0.0
    %671 = vmatpush1.msra.mxu0 %v20
    %672 = vmatprep.subr.mxu0 0.0
    %673 = vmatpush1.msra.mxu0 %v19
    %674 = vmatprep.subr.mxu0 0.0
    %675 = vmatpush2.msra.mxu0 0.0
    %676 = vmatprep.subr.mxu0 0.0
    %677 = vmatpush2.msra.mxu0 0.0
    %678 = vmatprep.subr.mxu0 0.0
    %679 = vmatpush2.msra.mxu0 0.0
    %680 = vmatprep.subr.mxu0 0.0
    %681 = vmatpush2.msra.mxu0 0.0
    %682 = vmatprep.subr.mxu0 0.0
    %683 = vmatpush2.msra.mxu0 0.0
    %684 = vmatprep.subr.mxu0 0.0
    %685 = vmatpush2.msra.mxu0 0.0
    %686 = vmatprep.subr.mxu0 0.0
    %687 = vmatpush2.msra.mxu0 0.0
    %688 = vmatprep.subr.mxu0 0.0
    %689 = vmatpush2.msra.mxu0 0.0
    %690 = vmatprep.subr.mxu0 0.0
    %691 = vmatpush2.msra.mxu0 0.0
    %692 = vmatprep.subr.mxu0 0.0
    %693 = vmatpush2.msra.mxu0 0.0
    %694 = vmatprep.subr.mxu0 0.0
    %695 = vmatpush2.msra.mxu0 0.0
    %696 = vmatprep.subr.mxu0 0.0
    %697 = vmatpush2.msra.mxu0 0.0
    %698 = vmatprep.subr.mxu0 0.0
    %699 = vmatpush2.msra.mxu0 0.0
    %700 = vmatprep.subr.mxu0 0.0
    %701 = vmatpush2.msra.mxu0 0.0
    %702 = vmatprep.subr.mxu0 0.0
    %703 = vmatpush2.msra.mxu0 0.0
    %704 = vmatprep.subr.mxu0 0.0
    %705 = vmatpush2.msra.mxu0 0.0
    %706 = vmatprep.mubr.f32.mxu0 0.0
    %707 = vmatmul.mubr.f32.gmra.mxu0 %v640
    %v708 = vpop.f32.mrf.mxu0
    %v709 = vadd.f32 0.0, %v708
    %v710 = vpop.f32.mrf.mxu0
    %711 = vdwg.mxu0
    %v712 = vadd.f32 %v145, %v709
    %v713 = vxor.u32 %v712, 2147483648
    %v714 = vmul.f32 %v713, 1.442695
    %v715 = vpow.pop %v714
    %v716 = vadd.f32 %v715, 1.0
    %v717 = vrcp.pop %v716
    %v718 = vmul.f32 1.0, %v717
    %719 = vmatprep.subr.mxu0 0.0
    %720 = vmatpush1.msra.mxu0 0.0
    %721 = vmatprep.subr.mxu0 0.0
    %722 = vmatpush1.msra.mxu0 0.0
    %723 = vmatprep.subr.mxu0 0.0
    %724 = vmatpush1.msra.mxu0 0.0
    %725 = vmatprep.subr.mxu0 0.0
    %726 = vmatpush1.msra.mxu0 0.0
    %727 = vmatprep.subr.mxu0 0.0
    %728 = vmatpush1.msra.mxu0 0.0
    %729 = vmatprep.subr.mxu0 0.0
    %730 = vmatpush1.msra.mxu0 0.0
    %731 = vmatprep.subr.mxu0 0.0
    %732 = vmatpush1.msra.mxu0 0.0
    %733 = vmatprep.subr.mxu0 0.0
    %734 = vmatpush1.msra.mxu0 0.0
    %735 = vmatprep.subr.mxu0 0.0
    %736 = vmatpush1.msra.mxu0 0.0
    %737 = vmatprep.subr.mxu0 0.0
    %738 = vmatpush1.msra.mxu0 0.0
    %739 = vmatprep.subr.mxu0 0.0
    %740 = vmatpush1.msra.mxu0 0.0
    %741 = vmatprep.subr.mxu0 0.0
    %742 = vmatpush1.msra.mxu0 0.0
    %743 = vmatprep.subr.mxu0 0.0
    %744 = vmatpush1.msra.mxu0 %v386
    %745 = vmatprep.subr.mxu0 0.0
    %746 = vmatpush1.msra.mxu0 %v384
    %747 = vmatprep.subr.mxu0 0.0
    %748 = vmatpush1.msra.mxu0 %v382
    %749 = vmatprep.subr.mxu0 0.0
    %750 = vmatpush1.msra.mxu0 %v380
    %751 = vmatprep.subr.mxu0 0.0
    %752 = vmatpush2.msra.mxu0 0.0
    %753 = vmatprep.subr.mxu0 0.0
    %754 = vmatpush2.msra.mxu0 0.0
    %755 = vmatprep.subr.mxu0 0.0
    %756 = vmatpush2.msra.mxu0 0.0
    %757 = vmatprep.subr.mxu0 0.0
    %758 = vmatpush2.msra.mxu0 0.0
    %759 = vmatprep.subr.mxu0 0.0
    %760 = vmatpush2.msra.mxu0 0.0
    %761 = vmatprep.subr.mxu0 0.0
    %762 = vmatpush2.msra.mxu0 0.0
    %763 = vmatprep.subr.mxu0 0.0
    %764 = vmatpush2.msra.mxu0 0.0
    %765 = vmatprep.subr.mxu0 0.0
    %766 = vmatpush2.msra.mxu0 0.0
    %767 = vmatprep.subr.mxu0 0.0
    %768 = vmatpush2.msra.mxu0 0.0
    %769 = vmatprep.subr.mxu0 0.0
    %770 = vmatpush2.msra.mxu0 0.0
    %771 = vmatprep.subr.mxu0 0.0
    %772 = vmatpush2.msra.mxu0 0.0
    %773 = vmatprep.subr.mxu0 0.0
    %774 = vmatpush2.msra.mxu0 0.0
    %775 = vmatprep.subr.mxu0 0.0
    %776 = vmatpush2.msra.mxu0 0.0
    %777 = vmatprep.subr.mxu0 0.0
    %778 = vmatpush2.msra.mxu0 0.0
    %779 = vmatprep.subr.mxu0 0.0
    %780 = vmatpush2.msra.mxu0 0.0
    %781 = vmatprep.subr.mxu0 0.0
    %782 = vmatpush2.msra.mxu0 0.0
    %783 = vmatprep.mubr.f32.mxu0 0.0
    %784 = vmatmul.mubr.f32.gmra.mxu0 %v640
    %v785 = vpop.f32.mrf.mxu0
    %v786 = vadd.f32 %v374, %v785
    %v787 = vpop.f32.mrf.mxu0
    %788 = vdwg.mxu0
    %v789 = vmul.f32 %v718, %v786
    %v790 = vadd.f32 %v262, %v789
    %v791 = vtanh.pop %v790
    %v792 = vsub.f32 %v638, %v791
    %794 = vrot.lane.b32.xlu0 %v792, 32
    %v795 = vpop.permute.xlu0 %794
    %v797 = vmul.f32 %v718, %v795
    %799 = vrot.lane.b32.xlu0 %v797, 96
    %v800 = vpop.permute.xlu0 %799
    %v802 = vadd.f32 %v791, %v800
    %v804 = vsel %vm290, %v802, 0
    %806 = vmatprep.subr.mxu0 0.0
    %807 = vmatpush1.msra.mxu0 0.0
    %808 = vmatprep.subr.mxu0 0.0
    %809 = vmatpush1.msra.mxu0 0.0
    %810 = vmatprep.subr.mxu0 0.0
    %811 = vmatpush1.msra.mxu0 0.0
    %812 = vmatprep.subr.mxu0 0.0
    %813 = vmatpush1.msra.mxu0 0.0
    %814 = vmatprep.subr.mxu0 0.0
    %815 = vmatpush1.msra.mxu0 0.0
    %816 = vmatprep.subr.mxu0 0.0
    %817 = vmatpush1.msra.mxu0 0.0
    %818 = vmatprep.subr.mxu0 0.0
    %819 = vmatpush1.msra.mxu0 0.0
    %820 = vmatprep.subr.mxu0 0.0
    %821 = vmatpush1.msra.mxu0 0.0
    %822 = vmatprep.subr.mxu0 0.0
    %823 = vmatpush1.msra.mxu0 0.0
    %824 = vmatprep.subr.mxu0 0.0
    %825 = vmatpush1.msra.mxu0 0.0
    %826 = vmatprep.subr.mxu0 0.0
    %827 = vmatpush1.msra.mxu0 0.0
    %828 = vmatprep.subr.mxu0 0.0
    %829 = vmatpush1.msra.mxu0 0.0
    %830 = vmatprep.subr.mxu0 0.0
    %831 = vmatpush1.msra.mxu0 %v22
    %832 = vmatprep.subr.mxu0 0.0
    %833 = vmatpush1.msra.mxu0 %v21
    %834 = vmatprep.subr.mxu0 0.0
    %835 = vmatpush1.msra.mxu0 %v20
    %836 = vmatprep.subr.mxu0 0.0
    %837 = vmatpush1.msra.mxu0 %v19
    %838 = vmatprep.subr.mxu0 0.0
    %839 = vmatpush2.msra.mxu0 0.0
    %840 = vmatprep.subr.mxu0 0.0
    %841 = vmatpush2.msra.mxu0 0.0
    %842 = vmatprep.subr.mxu0 0.0
    %843 = vmatpush2.msra.mxu0 0.0
    %844 = vmatprep.subr.mxu0 0.0
    %845 = vmatpush2.msra.mxu0 0.0
    %846 = vmatprep.subr.mxu0 0.0
    %847 = vmatpush2.msra.mxu0 0.0
    %848 = vmatprep.subr.mxu0 0.0
    %849 = vmatpush2.msra.mxu0 0.0
    %850 = vmatprep.subr.mxu0 0.0
    %851 = vmatpush2.msra.mxu0 0.0
    %852 = vmatprep.subr.mxu0 0.0
    %853 = vmatpush2.msra.mxu0 0.0
    %854 = vmatprep.subr.mxu0 0.0
    %855 = vmatpush2.msra.mxu0 0.0
    %856 = vmatprep.subr.mxu0 0.0
    %857 = vmatpush2.msra.mxu0 0.0
    %858 = vmatprep.subr.mxu0 0.0
    %859 = vmatpush2.msra.mxu0 0.0
    %860 = vmatprep.subr.mxu0 0.0
    %861 = vmatpush2.msra.mxu0 0.0
    %862 = vmatprep.subr.mxu0 0.0
    %863 = vmatpush2.msra.mxu0 0.0
    %864 = vmatprep.subr.mxu0 0.0
    %865 = vmatpush2.msra.mxu0 0.0
    %866 = vmatprep.subr.mxu0 0.0
    %867 = vmatpush2.msra.mxu0 0.0
    %868 = vmatprep.subr.mxu0 0.0
    %869 = vmatpush2.msra.mxu0 0.0
    %870 = vmatprep.mubr.f32.mxu0 0.0
    %871 = vmatmul.mubr.f32.gmra.mxu0 %v804
    %v872 = vpop.f32.mrf.mxu0
    %v873 = vadd.f32 0.0, %v872
    %v874 = vpop.f32.mrf.mxu0
    %875 = vdwg.mxu0
    %v876 = vadd.f32 %v150, %v873
    %v877 = vxor.u32 %v876, 2147483648
    %v878 = vmul.f32 %v877, 1.442695
    %v879 = vpow.pop %v878
    %v880 = vadd.f32 %v879, 1.0
    %v881 = vrcp.pop %v880
    %v882 = vmul.f32 1.0, %v881
    %883 = vmatprep.subr.mxu0 0.0
    %884 = vmatpush1.msra.mxu0 0.0
    %885 = vmatprep.subr.mxu0 0.0
    %886 = vmatpush1.msra.mxu0 0.0
    %887 = vmatprep.subr.mxu0 0.0
    %888 = vmatpush1.msra.mxu0 0.0
    %889 = vmatprep.subr.mxu0 0.0
    %890 = vmatpush1.msra.mxu0 0.0
    %891 = vmatprep.subr.mxu0 0.0
    %892 = vmatpush1.msra.mxu0 0.0
    %893 = vmatprep.subr.mxu0 0.0
    %894 = vmatpush1.msra.mxu0 0.0
    %895 = vmatprep.subr.mxu0 0.0
    %896 = vmatpush1.msra.mxu0 0.0
    %897 = vmatprep.subr.mxu0 0.0
    %898 = vmatpush1.msra.mxu0 0.0
    %899 = vmatprep.subr.mxu0 0.0
    %900 = vmatpush1.msra.mxu0 0.0
    %901 = vmatprep.subr.mxu0 0.0
    %902 = vmatpush1.msra.mxu0 0.0
    %903 = vmatprep.subr.mxu0 0.0
    %904 = vmatpush1.msra.mxu0 0.0
    %905 = vmatprep.subr.mxu0 0.0
    %906 = vmatpush1.msra.mxu0 0.0
    %907 = vmatprep.subr.mxu0 0.0
    %908 = vmatpush1.msra.mxu0 %v386
    %909 = vmatprep.subr.mxu0 0.0
    %910 = vmatpush1.msra.mxu0 %v384
    %911 = vmatprep.subr.mxu0 0.0
    %912 = vmatpush1.msra.mxu0 %v382
    %913 = vmatprep.subr.mxu0 0.0
    %914 = vmatpush1.msra.mxu0 %v380
    %915 = vmatprep.subr.mxu0 0.0
    %916 = vmatpush2.msra.mxu0 0.0
    %917 = vmatprep.subr.mxu0 0.0
    %918 = vmatpush2.msra.mxu0 0.0
    %919 = vmatprep.subr.mxu0 0.0
    %920 = vmatpush2.msra.mxu0 0.0
    %921 = vmatprep.subr.mxu0 0.0
    %922 = vmatpush2.msra.mxu0 0.0
    %923 = vmatprep.subr.mxu0 0.0
    %924 = vmatpush2.msra.mxu0 0.0
    %925 = vmatprep.subr.mxu0 0.0
    %926 = vmatpush2.msra.mxu0 0.0
    %927 = vmatprep.subr.mxu0 0.0
    %928 = vmatpush2.msra.mxu0 0.0
    %929 = vmatprep.subr.mxu0 0.0
    %930 = vmatpush2.msra.mxu0 0.0
    %931 = vmatprep.subr.mxu0 0.0
    %932 = vmatpush2.msra.mxu0 0.0
    %933 = vmatprep.subr.mxu0 0.0
    %934 = vmatpush2.msra.mxu0 0.0
    %935 = vmatprep.subr.mxu0 0.0
    %936 = vmatpush2.msra.mxu0 0.0
    %937 = vmatprep.subr.mxu0 0.0
    %938 = vmatpush2.msra.mxu0 0.0
    %939 = vmatprep.subr.mxu0 0.0
    %940 = vmatpush2.msra.mxu0 0.0
    %941 = vmatprep.subr.mxu0 0.0
    %942 = vmatpush2.msra.mxu0 0.0
    %943 = vmatprep.subr.mxu0 0.0
    %944 = vmatpush2.msra.mxu0 0.0
    %945 = vmatprep.subr.mxu0 0.0
    %946 = vmatpush2.msra.mxu0 0.0
    %947 = vmatprep.mubr.f32.mxu0 0.0
    %948 = vmatmul.mubr.f32.gmra.mxu0 %v804
    %v949 = vpop.f32.mrf.mxu0
    %v950 = vadd.f32 %v374, %v949
    %v951 = vpop.f32.mrf.mxu0
    %952 = vdwg.mxu0
    %v953 = vmul.f32 %v882, %v950
    %v954 = vadd.f32 %v267, %v953
    %v955 = vtanh.pop %v954
    %v956 = vsub.f32 %v802, %v955
    %958 = vrot.lane.b32.xlu0 %v956, 32
    %v959 = vpop.permute.xlu0 %958
    %v961 = vmul.f32 %v882, %v959
    %963 = vrot.lane.b32.xlu0 %v961, 96
    %v964 = vpop.permute.xlu0 %963
    %v966 = vadd.f32 %v955, %v964
    %v968 = vsel %vm290, %v966, 0
    %970 = vmatprep.subr.mxu0 0.0
    %971 = vmatpush1.msra.mxu0 0.0
    %972 = vmatprep.subr.mxu0 0.0
    %973 = vmatpush1.msra.mxu0 0.0
    %974 = vmatprep.subr.mxu0 0.0
    %975 = vmatpush1.msra.mxu0 0.0
    %976 = vmatprep.subr.mxu0 0.0
    %977 = vmatpush1.msra.mxu0 0.0
    %978 = vmatprep.subr.mxu0 0.0
    %979 = vmatpush1.msra.mxu0 0.0
    %980 = vmatprep.subr.mxu0 0.0
    %981 = vmatpush1.msra.mxu0 0.0
    %982 = vmatprep.subr.mxu0 0.0
    %983 = vmatpush1.msra.mxu0 0.0
    %984 = vmatprep.subr.mxu0 0.0
    %985 = vmatpush1.msra.mxu0 0.0
    %986 = vmatprep.subr.mxu0 0.0
    %987 = vmatpush1.msra.mxu0 0.0
    %988 = vmatprep.subr.mxu0 0.0
    %989 = vmatpush1.msra.mxu0 0.0
    %990 = vmatprep.subr.mxu0 0.0
    %991 = vmatpush1.msra.mxu0 0.0
    %992 = vmatprep.subr.mxu0 0.0
    %993 = vmatpush1.msra.mxu0 0.0
    %994 = vmatprep.subr.mxu0 0.0
    %995 = vmatpush1.msra.mxu0 %v22
    %996 = vmatprep.subr.mxu0 0.0
    %997 = vmatpush1.msra.mxu0 %v21
    %998 = vmatprep.subr.mxu0 0.0
    %999 = vmatpush1.msra.mxu0 %v20
    %1000 = vmatprep.subr.mxu0 0.0
    %1001 = vmatpush1.msra.mxu0 %v19
    %1002 = vmatprep.subr.mxu0 0.0
    %1003 = vmatpush2.msra.mxu0 0.0
    %1004 = vmatprep.subr.mxu0 0.0
    %1005 = vmatpush2.msra.mxu0 0.0
    %1006 = vmatprep.subr.mxu0 0.0
    %1007 = vmatpush2.msra.mxu0 0.0
    %1008 = vmatprep.subr.mxu0 0.0
    %1009 = vmatpush2.msra.mxu0 0.0
    %1010 = vmatprep.subr.mxu0 0.0
    %1011 = vmatpush2.msra.mxu0 0.0
    %1012 = vmatprep.subr.mxu0 0.0
    %1013 = vmatpush2.msra.mxu0 0.0
    %1014 = vmatprep.subr.mxu0 0.0
    %1015 = vmatpush2.msra.mxu0 0.0
    %1016 = vmatprep.subr.mxu0 0.0
    %1017 = vmatpush2.msra.mxu0 0.0
    %1018 = vmatprep.subr.mxu0 0.0
    %1019 = vmatpush2.msra.mxu0 0.0
    %1020 = vmatprep.subr.mxu0 0.0
    %1021 = vmatpush2.msra.mxu0 0.0
    %1022 = vmatprep.subr.mxu0 0.0
    %1023 = vmatpush2.msra.mxu0 0.0
    %1024 = vmatprep.subr.mxu0 0.0
    %1025 = vmatpush2.msra.mxu0 0.0
    %1026 = vmatprep.subr.mxu0 0.0
    %1027 = vmatpush2.msra.mxu0 0.0
    %1028 = vmatprep.subr.mxu0 0.0
    %1029 = vmatpush2.msra.mxu0 0.0
    %1030 = vmatprep.subr.mxu0 0.0
    %1031 = vmatpush2.msra.mxu0 0.0
    %1032 = vmatprep.subr.mxu0 0.0
    %1033 = vmatpush2.msra.mxu0 0.0
    %1034 = vmatprep.mubr.f32.mxu0 0.0
    %1035 = vmatmul.mubr.f32.gmra.mxu0 %v968
    %v1036 = vpop.f32.mrf.mxu0
    %v1037 = vadd.f32 0.0, %v1036
    %v1038 = vpop.f32.mrf.mxu0
    %1039 = vdwg.mxu0
    %v1040 = vadd.f32 %v155, %v1037
    %v1041 = vxor.u32 %v1040, 2147483648
    %v1042 = vmul.f32 %v1041, 1.442695
    %v1043 = vpow.pop %v1042
    %v1044 = vadd.f32 %v1043, 1.0
    %v1045 = vrcp.pop %v1044
    %v1046 = vmul.f32 1.0, %v1045
    %1047 = vmatprep.subr.mxu0 0.0
    %1048 = vmatpush1.msra.mxu0 0.0
    %1049 = vmatprep.subr.mxu0 0.0
    %1050 = vmatpush1.msra.mxu0 0.0
    %1051 = vmatprep.subr.mxu0 0.0
    %1052 = vmatpush1.msra.mxu0 0.0
    %1053 = vmatprep.subr.mxu0 0.0
    %1054 = vmatpush1.msra.mxu0 0.0
    %1055 = vmatprep.subr.mxu0 0.0
    %1056 = vmatpush1.msra.mxu0 0.0
    %1057 = vmatprep.subr.mxu0 0.0
    %1058 = vmatpush1.msra.mxu0 0.0
    %1059 = vmatprep.subr.mxu0 0.0
    %1060 = vmatpush1.msra.mxu0 0.0
    %1061 = vmatprep.subr.mxu0 0.0
    %1062 = vmatpush1.msra.mxu0 0.0
    %1063 = vmatprep.subr.mxu0 0.0
    %1064 = vmatpush1.msra.mxu0 0.0
    %1065 = vmatprep.subr.mxu0 0.0
    %1066 = vmatpush1.msra.mxu0 0.0
    %1067 = vmatprep.subr.mxu0 0.0
    %1068 = vmatpush1.msra.mxu0 0.0
    %1069 = vmatprep.subr.mxu0 0.0
    %1070 = vmatpush1.msra.mxu0 0.0
    %1071 = vmatprep.subr.mxu0 0.0
    %1072 = vmatpush1.msra.mxu0 %v386
    %1073 = vmatprep.subr.mxu0 0.0
    %1074 = vmatpush1.msra.mxu0 %v384
    %1075 = vmatprep.subr.mxu0 0.0
    %1076 = vmatpush1.msra.mxu0 %v382
    %1077 = vmatprep.subr.mxu0 0.0
    %1078 = vmatpush1.msra.mxu0 %v380
    %1079 = vmatprep.subr.mxu0 0.0
    %1080 = vmatpush2.msra.mxu0 0.0
    %1081 = vmatprep.subr.mxu0 0.0
    %1082 = vmatpush2.msra.mxu0 0.0
    %1083 = vmatprep.subr.mxu0 0.0
    %1084 = vmatpush2.msra.mxu0 0.0
    %1085 = vmatprep.subr.mxu0 0.0
    %1086 = vmatpush2.msra.mxu0 0.0
    %1087 = vmatprep.subr.mxu0 0.0
    %1088 = vmatpush2.msra.mxu0 0.0
    %1089 = vmatprep.subr.mxu0 0.0
    %1090 = vmatpush2.msra.mxu0 0.0
    %1091 = vmatprep.subr.mxu0 0.0
    %1092 = vmatpush2.msra.mxu0 0.0
    %1093 = vmatprep.subr.mxu0 0.0
    %1094 = vmatpush2.msra.mxu0 0.0
    %1095 = vmatprep.subr.mxu0 0.0
    %1096 = vmatpush2.msra.mxu0 0.0
    %1097 = vmatprep.subr.mxu0 0.0
    %1098 = vmatpush2.msra.mxu0 0.0
    %1099 = vmatprep.subr.mxu0 0.0
    %1100 = vmatpush2.msra.mxu0 0.0
    %1101 = vmatprep.subr.mxu0 0.0
    %1102 = vmatpush2.msra.mxu0 0.0
    %1103 = vmatprep.subr.mxu0 0.0
    %1104 = vmatpush2.msra.mxu0 0.0
    %1105 = vmatprep.subr.mxu0 0.0
    %1106 = vmatpush2.msra.mxu0 0.0
    %1107 = vmatprep.subr.mxu0 0.0
    %1108 = vmatpush2.msra.mxu0 0.0
    %1109 = vmatprep.subr.mxu0 0.0
    %1110 = vmatpush2.msra.mxu0 0.0
    %1111 = vmatprep.mubr.f32.mxu0 0.0
    %1112 = vmatmul.mubr.f32.gmra.mxu0 %v968
    %v1113 = vpop.f32.mrf.mxu0
    %v1114 = vadd.f32 %v374, %v1113
    %v1115 = vpop.f32.mrf.mxu0
    %1116 = vdwg.mxu0
    %v1117 = vmul.f32 %v1046, %v1114
    %v1118 = vadd.f32 %v272, %v1117
    %v1119 = vtanh.pop %v1118
    %v1120 = vsub.f32 %v966, %v1119
    %1122 = vrot.lane.b32.xlu0 %v1120, 32
    %v1123 = vpop.permute.xlu0 %1122
    %v1125 = vmul.f32 %v1046, %v1123
    %1127 = vrot.lane.b32.xlu0 %v1125, 96
    %v1128 = vpop.permute.xlu0 %1127
    %v1130 = vadd.f32 %v1119, %v1128
    %v1132 = vsel %vm290, %v1130, 0
    %1134 = vmatprep.subr.mxu0 0.0
    %1135 = vmatpush1.msra.mxu0 0.0
    %1136 = vmatprep.subr.mxu0 0.0
    %1137 = vmatpush1.msra.mxu0 0.0
    %1138 = vmatprep.subr.mxu0 0.0
    %1139 = vmatpush1.msra.mxu0 0.0
    %1140 = vmatprep.subr.mxu0 0.0
    %1141 = vmatpush1.msra.mxu0 0.0
    %1142 = vmatprep.subr.mxu0 0.0
    %1143 = vmatpush1.msra.mxu0 0.0
    %1144 = vmatprep.subr.mxu0 0.0
    %1145 = vmatpush1.msra.mxu0 0.0
    %1146 = vmatprep.subr.mxu0 0.0
    %1147 = vmatpush1.msra.mxu0 0.0
    %1148 = vmatprep.subr.mxu0 0.0
    %1149 = vmatpush1.msra.mxu0 0.0
    %1150 = vmatprep.subr.mxu0 0.0
    %1151 = vmatpush1.msra.mxu0 0.0
    %1152 = vmatprep.subr.mxu0 0.0
    %1153 = vmatpush1.msra.mxu0 0.0
    %1154 = vmatprep.subr.mxu0 0.0
    %1155 = vmatpush1.msra.mxu0 0.0
    %1156 = vmatprep.subr.mxu0 0.0
    %1157 = vmatpush1.msra.mxu0 0.0
    %1158 = vmatprep.subr.mxu0 0.0
    %1159 = vmatpush1.msra.mxu0 %v22
    %1160 = vmatprep.subr.mxu0 0.0
    %1161 = vmatpush1.msra.mxu0 %v21
    %1162 = vmatprep.subr.mxu0 0.0
    %1163 = vmatpush1.msra.mxu0 %v20
    %1164 = vmatprep.subr.mxu0 0.0
    %1165 = vmatpush1.msra.mxu0 %v19
    %1166 = vmatprep.subr.mxu0 0.0
    %1167 = vmatpush2.msra.mxu0 0.0
    %1168 = vmatprep.subr.mxu0 0.0
    %1169 = vmatpush2.msra.mxu0 0.0
    %1170 = vmatprep.subr.mxu0 0.0
    %1171 = vmatpush2.msra.mxu0 0.0
    %1172 = vmatprep.subr.mxu0 0.0
    %1173 = vmatpush2.msra.mxu0 0.0
    %1174 = vmatprep.subr.mxu0 0.0
    %1175 = vmatpush2.msra.mxu0 0.0
    %1176 = vmatprep.subr.mxu0 0.0
    %1177 = vmatpush2.msra.mxu0 0.0
    %1178 = vmatprep.subr.mxu0 0.0
    %1179 = vmatpush2.msra.mxu0 0.0
    %1180 = vmatprep.subr.mxu0 0.0
    %1181 = vmatpush2.msra.mxu0 0.0
    %1182 = vmatprep.subr.mxu0 0.0
    %1183 = vmatpush2.msra.mxu0 0.0
    %1184 = vmatprep.subr.mxu0 0.0
    %1185 = vmatpush2.msra.mxu0 0.0
    %1186 = vmatprep.subr.mxu0 0.0
    %1187 = vmatpush2.msra.mxu0 0.0
    %1188 = vmatprep.subr.mxu0 0.0
    %1189 = vmatpush2.msra.mxu0 0.0
    %1190 = vmatprep.subr.mxu0 0.0
    %1191 = vmatpush2.msra.mxu0 0.0
    %1192 = vmatprep.subr.mxu0 0.0
    %1193 = vmatpush2.msra.mxu0 0.0
    %1194 = vmatprep.subr.mxu0 0.0
    %1195 = vmatpush2.msra.mxu0 0.0
    %1196 = vmatprep.subr.mxu0 0.0
    %1197 = vmatpush2.msra.mxu0 0.0
    %1198 = vmatprep.mubr.f32.mxu0 0.0
    %1199 = vmatmul.mubr.f32.gmra.mxu0 %v1132
    %v1200 = vpop.f32.mrf.mxu0
    %v1201 = vadd.f32 0.0, %v1200
    %v1202 = vpop.f32.mrf.mxu0
    %1203 = vdwg.mxu0
    %v1204 = vadd.f32 %v160, %v1201
    %v1205 = vxor.u32 %v1204, 2147483648
    %v1206 = vmul.f32 %v1205, 1.442695
    %v1207 = vpow.pop %v1206
    %v1208 = vadd.f32 %v1207, 1.0
    %v1209 = vrcp.pop %v1208
    %v1210 = vmul.f32 1.0, %v1209
    %1211 = vmatprep.subr.mxu0 0.0
    %1212 = vmatpush1.msra.mxu0 0.0
    %1213 = vmatprep.subr.mxu0 0.0
    %1214 = vmatpush1.msra.mxu0 0.0
    %1215 = vmatprep.subr.mxu0 0.0
    %1216 = vmatpush1.msra.mxu0 0.0
    %1217 = vmatprep.subr.mxu0 0.0
    %1218 = vmatpush1.msra.mxu0 0.0
    %1219 = vmatprep.subr.mxu0 0.0
    %1220 = vmatpush1.msra.mxu0 0.0
    %1221 = vmatprep.subr.mxu0 0.0
    %1222 = vmatpush1.msra.mxu0 0.0
    %1223 = vmatprep.subr.mxu0 0.0
    %1224 = vmatpush1.msra.mxu0 0.0
    %1225 = vmatprep.subr.mxu0 0.0
    %1226 = vmatpush1.msra.mxu0 0.0
    %1227 = vmatprep.subr.mxu0 0.0
    %1228 = vmatpush1.msra.mxu0 0.0
    %1229 = vmatprep.subr.mxu0 0.0
    %1230 = vmatpush1.msra.mxu0 0.0
    %1231 = vmatprep.subr.mxu0 0.0
    %1232 = vmatpush1.msra.mxu0 0.0
    %1233 = vmatprep.subr.mxu0 0.0
    %1234 = vmatpush1.msra.mxu0 0.0
    %1235 = vmatprep.subr.mxu0 0.0
    %1236 = vmatpush1.msra.mxu0 %v386
    %1237 = vmatprep.subr.mxu0 0.0
    %1238 = vmatpush1.msra.mxu0 %v384
    %1239 = vmatprep.subr.mxu0 0.0
    %1240 = vmatpush1.msra.mxu0 %v382
    %1241 = vmatprep.subr.mxu0 0.0
    %1242 = vmatpush1.msra.mxu0 %v380
    %1243 = vmatprep.subr.mxu0 0.0
    %1244 = vmatpush2.msra.mxu0 0.0
    %1245 = vmatprep.subr.mxu0 0.0
    %1246 = vmatpush2.msra.mxu0 0.0
    %1247 = vmatprep.subr.mxu0 0.0
    %1248 = vmatpush2.msra.mxu0 0.0
    %1249 = vmatprep.subr.mxu0 0.0
    %1250 = vmatpush2.msra.mxu0 0.0
    %1251 = vmatprep.subr.mxu0 0.0
    %1252 = vmatpush2.msra.mxu0 0.0
    %1253 = vmatprep.subr.mxu0 0.0
    %1254 = vmatpush2.msra.mxu0 0.0
    %1255 = vmatprep.subr.mxu0 0.0
    %1256 = vmatpush2.msra.mxu0 0.0
    %1257 = vmatprep.subr.mxu0 0.0
    %1258 = vmatpush2.msra.mxu0 0.0
    %1259 = vmatprep.subr.mxu0 0.0
    %1260 = vmatpush2.msra.mxu0 0.0
    %1261 = vmatprep.subr.mxu0 0.0
    %1262 = vmatpush2.msra.mxu0 0.0
    %1263 = vmatprep.subr.mxu0 0.0
    %1264 = vmatpush2.msra.mxu0 0.0
    %1265 = vmatprep.subr.mxu0 0.0
    %1266 = vmatpush2.msra.mxu0 0.0
    %1267 = vmatprep.subr.mxu0 0.0
    %1268 = vmatpush2.msra.mxu0 0.0
    %1269 = vmatprep.subr.mxu0 0.0
    %1270 = vmatpush2.msra.mxu0 0.0
    %1271 = vmatprep.subr.mxu0 0.0
    %1272 = vmatpush2.msra.mxu0 0.0
    %1273 = vmatprep.subr.mxu0 0.0
    %1274 = vmatpush2.msra.mxu0 0.0
    %1275 = vmatprep.mubr.f32.mxu0 0.0
    %1276 = vmatmul.mubr.f32.gmra.mxu0 %v1132
    %v1277 = vpop.f32.mrf.mxu0
    %v1278 = vadd.f32 %v374, %v1277
    %v1279 = vpop.f32.mrf.mxu0
    %1280 = vdwg.mxu0
    %v1281 = vmul.f32 %v1210, %v1278
    %v1282 = vadd.f32 %v277, %v1281
    %v1283 = vtanh.pop %v1282
    %v1284 = vsub.f32 %v1130, %v1283
    %1286 = vrot.lane.b32.xlu0 %v1284, 32
    %v1287 = vpop.permute.xlu0 %1286
    %v1289 = vmul.f32 %v1210, %v1287
    %1291 = vrot.lane.b32.xlu0 %v1289, 96
    %v1292 = vpop.permute.xlu0 %1291
    %v1294 = vadd.f32 %v1283, %v1292
    %v1296 = vsel %vm290, %v1294, 0
    %1298 = vmatprep.subr.mxu0 0.0
    %1299 = vmatpush1.msra.mxu0 0.0
    %1300 = vmatprep.subr.mxu0 0.0
    %1301 = vmatpush1.msra.mxu0 0.0
    %1302 = vmatprep.subr.mxu0 0.0
    %1303 = vmatpush1.msra.mxu0 0.0
    %1304 = vmatprep.subr.mxu0 0.0
    %1305 = vmatpush1.msra.mxu0 0.0
    %1306 = vmatprep.subr.mxu0 0.0
    %1307 = vmatpush1.msra.mxu0 0.0
    %1308 = vmatprep.subr.mxu0 0.0
    %1309 = vmatpush1.msra.mxu0 0.0
    %1310 = vmatprep.subr.mxu0 0.0
    %1311 = vmatpush1.msra.mxu0 0.0
    %1312 = vmatprep.subr.mxu0 0.0
    %1313 = vmatpush1.msra.mxu0 0.0
    %1314 = vmatprep.subr.mxu0 0.0
    %1315 = vmatpush1.msra.mxu0 0.0
    %1316 = vmatprep.subr.mxu0 0.0
    %1317 = vmatpush1.msra.mxu0 0.0
    %1318 = vmatprep.subr.mxu0 0.0
    %1319 = vmatpush1.msra.mxu0 0.0
    %1320 = vmatprep.subr.mxu0 0.0
    %1321 = vmatpush1.msra.mxu0 0.0
    %1322 = vmatprep.subr.mxu0 0.0
    %1323 = vmatpush1.msra.mxu0 %v22
    %1324 = vmatprep.subr.mxu0 0.0
    %1325 = vmatpush1.msra.mxu0 %v21
    %1326 = vmatprep.subr.mxu0 0.0
    %1327 = vmatpush1.msra.mxu0 %v20
    %1328 = vmatprep.subr.mxu0 0.0
    %1329 = vmatpush1.msra.mxu0 %v19
    %1330 = vmatprep.subr.mxu0 0.0
    %1331 = vmatpush2.msra.mxu0 0.0
    %1332 = vmatprep.subr.mxu0 0.0
    %1333 = vmatpush2.msra.mxu0 0.0
    %1334 = vmatprep.subr.mxu0 0.0
    %1335 = vmatpush2.msra.mxu0 0.0
    %1336 = vmatprep.subr.mxu0 0.0
    %1337 = vmatpush2.msra.mxu0 0.0
    %1338 = vmatprep.subr.mxu0 0.0
    %1339 = vmatpush2.msra.mxu0 0.0
    %1340 = vmatprep.subr.mxu0 0.0
    %1341 = vmatpush2.msra.mxu0 0.0
    %1342 = vmatprep.subr.mxu0 0.0
    %1343 = vmatpush2.msra.mxu0 0.0
    %1344 = vmatprep.subr.mxu0 0.0
    %1345 = vmatpush2.msra.mxu0 0.0
    %1346 = vmatprep.subr.mxu0 0.0
    %1347 = vmatpush2.msra.mxu0 0.0
    %1348 = vmatprep.subr.mxu0 0.0
    %1349 = vmatpush2.msra.mxu0 0.0
    %1350 = vmatprep.subr.mxu0 0.0
    %1351 = vmatpush2.msra.mxu0 0.0
    %1352 = vmatprep.subr.mxu0 0.0
    %1353 = vmatpush2.msra.mxu0 0.0
    %1354 = vmatprep.subr.mxu0 0.0
    %1355 = vmatpush2.msra.mxu0 0.0
    %1356 = vmatprep.subr.mxu0 0.0
    %1357 = vmatpush2.msra.mxu0 0.0
    %1358 = vmatprep.subr.mxu0 0.0
    %1359 = vmatpush2.msra.mxu0 0.0
    %1360 = vmatprep.subr.mxu0 0.0
    %1361 = vmatpush2.msra.mxu0 0.0
    %1362 = vmatprep.mubr.f32.mxu0 0.0
    %1363 = vmatmul.mubr.f32.gmra.mxu0 %v1296
    %v1364 = vpop.f32.mrf.mxu0
    %v1365 = vadd.f32 0.0, %v1364
    %v1366 = vpop.f32.mrf.mxu0
    %1367 = vdwg.mxu0
    %v1368 = vadd.f32 %v165, %v1365
    %v1369 = vxor.u32 %v1368, 2147483648
    %v1370 = vmul.f32 %v1369, 1.442695
    %v1371 = vpow.pop %v1370
    %v1372 = vadd.f32 %v1371, 1.0
    %v1373 = vrcp.pop %v1372
    %v1374 = vmul.f32 1.0, %v1373
    %1375 = vmatprep.subr.mxu0 0.0
    %1376 = vmatpush1.msra.mxu0 0.0
    %1377 = vmatprep.subr.mxu0 0.0
    %1378 = vmatpush1.msra.mxu0 0.0
    %1379 = vmatprep.subr.mxu0 0.0
    %1380 = vmatpush1.msra.mxu0 0.0
    %1381 = vmatprep.subr.mxu0 0.0
    %1382 = vmatpush1.msra.mxu0 0.0
    %1383 = vmatprep.subr.mxu0 0.0
    %1384 = vmatpush1.msra.mxu0 0.0
    %1385 = vmatprep.subr.mxu0 0.0
    %1386 = vmatpush1.msra.mxu0 0.0
    %1387 = vmatprep.subr.mxu0 0.0
    %1388 = vmatpush1.msra.mxu0 0.0
    %1389 = vmatprep.subr.mxu0 0.0
    %1390 = vmatpush1.msra.mxu0 0.0
    %1391 = vmatprep.subr.mxu0 0.0
    %1392 = vmatpush1.msra.mxu0 0.0
    %1393 = vmatprep.subr.mxu0 0.0
    %1394 = vmatpush1.msra.mxu0 0.0
    %1395 = vmatprep.subr.mxu0 0.0
    %1396 = vmatpush1.msra.mxu0 0.0
    %1397 = vmatprep.subr.mxu0 0.0
    %1398 = vmatpush1.msra.mxu0 0.0
    %1399 = vmatprep.subr.mxu0 0.0
    %1400 = vmatpush1.msra.mxu0 %v386
    %1401 = vmatprep.subr.mxu0 0.0
    %1402 = vmatpush1.msra.mxu0 %v384
    %1403 = vmatprep.subr.mxu0 0.0
    %1404 = vmatpush1.msra.mxu0 %v382
    %1405 = vmatprep.subr.mxu0 0.0
    %1406 = vmatpush1.msra.mxu0 %v380
    %1407 = vmatprep.subr.mxu0 0.0
    %1408 = vmatpush2.msra.mxu0 0.0
    %1409 = vmatprep.subr.mxu0 0.0
    %1410 = vmatpush2.msra.mxu0 0.0
    %1411 = vmatprep.subr.mxu0 0.0
    %1412 = vmatpush2.msra.mxu0 0.0
    %1413 = vmatprep.subr.mxu0 0.0
    %1414 = vmatpush2.msra.mxu0 0.0
    %1415 = vmatprep.subr.mxu0 0.0
    %1416 = vmatpush2.msra.mxu0 0.0
    %1417 = vmatprep.subr.mxu0 0.0
    %1418 = vmatpush2.msra.mxu0 0.0
    %1419 = vmatprep.subr.mxu0 0.0
    %1420 = vmatpush2.msra.mxu0 0.0
    %1421 = vmatprep.subr.mxu0 0.0
    %1422 = vmatpush2.msra.mxu0 0.0
    %1423 = vmatprep.subr.mxu0 0.0
    %1424 = vmatpush2.msra.mxu0 0.0
    %1425 = vmatprep.subr.mxu0 0.0
    %1426 = vmatpush2.msra.mxu0 0.0
    %1427 = vmatprep.subr.mxu0 0.0
    %1428 = vmatpush2.msra.mxu0 0.0
    %1429 = vmatprep.subr.mxu0 0.0
    %1430 = vmatpush2.msra.mxu0 0.0
    %1431 = vmatprep.subr.mxu0 0.0
    %1432 = vmatpush2.msra.mxu0 0.0
    %1433 = vmatprep.subr.mxu0 0.0
    %1434 = vmatpush2.msra.mxu0 0.0
    %1435 = vmatprep.subr.mxu0 0.0
    %1436 = vmatpush2.msra.mxu0 0.0
    %1437 = vmatprep.subr.mxu0 0.0
    %1438 = vmatpush2.msra.mxu0 0.0
    %1439 = vmatprep.mubr.f32.mxu0 0.0
    %1440 = vmatmul.mubr.f32.gmra.mxu0 %v1296
    %v1441 = vpop.f32.mrf.mxu0
    %v1442 = vadd.f32 %v374, %v1441
    %v1443 = vpop.f32.mrf.mxu0
    %1444 = vdwg.mxu0
    %v1445 = vmul.f32 %v1374, %v1442
    %v1446 = vadd.f32 %v282, %v1445
    %v1447 = vtanh.pop %v1446
    %v1448 = vsub.f32 %v1294, %v1447
    %1450 = vrot.lane.b32.xlu0 %v1448, 32
    %v1451 = vpop.permute.xlu0 %1450
    %v1453 = vmul.f32 %v1374, %v1451
    %1455 = vrot.lane.b32.xlu0 %v1453, 96
    %v1456 = vpop.permute.xlu0 %1455
    %v1458 = vadd.f32 %v1447, %v1456
    %v1460 = vsel %vm290, %v1458, 0
    %1462 = vmatprep.subr.mxu0 0.0
    %1463 = vmatpush1.msra.mxu0 0.0
    %1464 = vmatprep.subr.mxu0 0.0
    %1465 = vmatpush1.msra.mxu0 0.0
    %1466 = vmatprep.subr.mxu0 0.0
    %1467 = vmatpush1.msra.mxu0 0.0
    %1468 = vmatprep.subr.mxu0 0.0
    %1469 = vmatpush1.msra.mxu0 0.0
    %1470 = vmatprep.subr.mxu0 0.0
    %1471 = vmatpush1.msra.mxu0 0.0
    %1472 = vmatprep.subr.mxu0 0.0
    %1473 = vmatpush1.msra.mxu0 0.0
    %1474 = vmatprep.subr.mxu0 0.0
    %1475 = vmatpush1.msra.mxu0 0.0
    %1476 = vmatprep.subr.mxu0 0.0
    %1477 = vmatpush1.msra.mxu0 0.0
    %1478 = vmatprep.subr.mxu0 0.0
    %1479 = vmatpush1.msra.mxu0 0.0
    %1480 = vmatprep.subr.mxu0 0.0
    %1481 = vmatpush1.msra.mxu0 0.0
    %1482 = vmatprep.subr.mxu0 0.0
    %1483 = vmatpush1.msra.mxu0 0.0
    %1484 = vmatprep.subr.mxu0 0.0
    %1485 = vmatpush1.msra.mxu0 0.0
    %1486 = vmatprep.subr.mxu0 0.0
    %1487 = vmatpush1.msra.mxu0 %v22
    %1488 = vmatprep.subr.mxu0 0.0
    %1489 = vmatpush1.msra.mxu0 %v21
    %1490 = vmatprep.subr.mxu0 0.0
    %1491 = vmatpush1.msra.mxu0 %v20
    %1492 = vmatprep.subr.mxu0 0.0
    %1493 = vmatpush1.msra.mxu0 %v19
    %1494 = vmatprep.subr.mxu0 0.0
    %1495 = vmatpush2.msra.mxu0 0.0
    %1496 = vmatprep.subr.mxu0 0.0
    %1497 = vmatpush2.msra.mxu0 0.0
    %1498 = vmatprep.subr.mxu0 0.0
    %1499 = vmatpush2.msra.mxu0 0.0
    %1500 = vmatprep.subr.mxu0 0.0
    %1501 = vmatpush2.msra.mxu0 0.0
    %1502 = vmatprep.subr.mxu0 0.0
    %1503 = vmatpush2.msra.mxu0 0.0
    %1504 = vmatprep.subr.mxu0 0.0
    %1505 = vmatpush2.msra.mxu0 0.0
    %1506 = vmatprep.subr.mxu0 0.0
    %1507 = vmatpush2.msra.mxu0 0.0
    %1508 = vmatprep.subr.mxu0 0.0
    %1509 = vmatpush2.msra.mxu0 0.0
    %1510 = vmatprep.subr.mxu0 0.0
    %1511 = vmatpush2.msra.mxu0 0.0
    %1512 = vmatprep.subr.mxu0 0.0
    %1513 = vmatpush2.msra.mxu0 0.0
    %1514 = vmatprep.subr.mxu0 0.0
    %1515 = vmatpush2.msra.mxu0 0.0
    %1516 = vmatprep.subr.mxu0 0.0
    %1517 = vmatpush2.msra.mxu0 0.0
    %1518 = vmatprep.subr.mxu0 0.0
    %1519 = vmatpush2.msra.mxu0 0.0
    %1520 = vmatprep.subr.mxu0 0.0
    %1521 = vmatpush2.msra.mxu0 0.0
    %1522 = vmatprep.subr.mxu0 0.0
    %1523 = vmatpush2.msra.mxu0 0.0
    %1524 = vmatprep.subr.mxu0 0.0
    %1525 = vmatpush2.msra.mxu0 0.0
    %1526 = vmatprep.mubr.f32.mxu0 0.0
    %1527 = vmatmul.mubr.f32.gmra.mxu0 %v1460
    %v1528 = vpop.f32.mrf.mxu0
    %v1529 = vadd.f32 0.0, %v1528
    %v1530 = vpop.f32.mrf.mxu0
    %1531 = vdwg.mxu0
    %v1532 = vadd.f32 %v170, %v1529
    %v1533 = vxor.u32 %v1532, 2147483648
    %v1534 = vmul.f32 %v1533, 1.442695
    %v1535 = vpow.pop %v1534
    %v1536 = vadd.f32 %v1535, 1.0
    %v1537 = vrcp.pop %v1536
    %v1538 = vmul.f32 1.0, %v1537
    %1539 = vmatprep.subr.mxu0 0.0
    %1540 = vmatpush1.msra.mxu0 0.0
    %1541 = vmatprep.subr.mxu0 0.0
    %1542 = vmatpush1.msra.mxu0 0.0
    %1543 = vmatprep.subr.mxu0 0.0
    %1544 = vmatpush1.msra.mxu0 0.0
    %1545 = vmatprep.subr.mxu0 0.0
    %1546 = vmatpush1.msra.mxu0 0.0
    %1547 = vmatprep.subr.mxu0 0.0
    %1548 = vmatpush1.msra.mxu0 0.0
    %1549 = vmatprep.subr.mxu0 0.0
    %1550 = vmatpush1.msra.mxu0 0.0
    %1551 = vmatprep.subr.mxu0 0.0
    %1552 = vmatpush1.msra.mxu0 0.0
    %1553 = vmatprep.subr.mxu0 0.0
    %1554 = vmatpush1.msra.mxu0 0.0
    %1555 = vmatprep.subr.mxu0 0.0
    %1556 = vmatpush1.msra.mxu0 0.0
    %1557 = vmatprep.subr.mxu0 0.0
    %1558 = vmatpush1.msra.mxu0 0.0
    %1559 = vmatprep.subr.mxu0 0.0
    %1560 = vmatpush1.msra.mxu0 0.0
    %1561 = vmatprep.subr.mxu0 0.0
    %1562 = vmatpush1.msra.mxu0 0.0
    %1563 = vmatprep.subr.mxu0 0.0
    %1564 = vmatpush1.msra.mxu0 %v386
    %1565 = vmatprep.subr.mxu0 0.0
    %1566 = vmatpush1.msra.mxu0 %v384
    %1567 = vmatprep.subr.mxu0 0.0
    %1568 = vmatpush1.msra.mxu0 %v382
    %1569 = vmatprep.subr.mxu0 0.0
    %1570 = vmatpush1.msra.mxu0 %v380
    %1571 = vmatprep.subr.mxu0 0.0
    %1572 = vmatpush2.msra.mxu0 0.0
    %1573 = vmatprep.subr.mxu0 0.0
    %1574 = vmatpush2.msra.mxu0 0.0
    %1575 = vmatprep.subr.mxu0 0.0
    %1576 = vmatpush2.msra.mxu0 0.0
    %1577 = vmatprep.subr.mxu0 0.0
    %1578 = vmatpush2.msra.mxu0 0.0
    %1579 = vmatprep.subr.mxu0 0.0
    %1580 = vmatpush2.msra.mxu0 0.0
    %1581 = vmatprep.subr.mxu0 0.0
    %1582 = vmatpush2.msra.mxu0 0.0
    %1583 = vmatprep.subr.mxu0 0.0
    %1584 = vmatpush2.msra.mxu0 0.0
    %1585 = vmatprep.subr.mxu0 0.0
    %1586 = vmatpush2.msra.mxu0 0.0
    %1587 = vmatprep.subr.mxu0 0.0
    %1588 = vmatpush2.msra.mxu0 0.0
    %1589 = vmatprep.subr.mxu0 0.0
    %1590 = vmatpush2.msra.mxu0 0.0
    %1591 = vmatprep.subr.mxu0 0.0
    %1592 = vmatpush2.msra.mxu0 0.0
    %1593 = vmatprep.subr.mxu0 0.0
    %1594 = vmatpush2.msra.mxu0 0.0
    %1595 = vmatprep.subr.mxu0 0.0
    %1596 = vmatpush2.msra.mxu0 0.0
    %1597 = vmatprep.subr.mxu0 0.0
    %1598 = vmatpush2.msra.mxu0 0.0
    %1599 = vmatprep.subr.mxu0 0.0
    %1600 = vmatpush2.msra.mxu0 0.0
    %1601 = vmatprep.subr.mxu0 0.0
    %1602 = vmatpush2.msra.mxu0 0.0
    %1603 = vmatprep.mubr.f32.mxu0 0.0
    %1604 = vmatmul.mubr.f32.gmra.mxu0 %v1460
    %v1605 = vpop.f32.mrf.mxu0
    %v1606 = vadd.f32 %v374, %v1605
    %v1607 = vpop.f32.mrf.mxu0
    %1608 = vdwg.mxu0
    %v1609 = vmul.f32 %v1538, %v1606
    %v1610 = vadd.f32 %v287, %v1609
    %v1611 = vtanh.pop %v1610
    %v1612 = vsub.f32 %v1458, %v1611
    %1614 = vrot.lane.b32.xlu0 %v1612, 32
    %v1615 = vpop.permute.xlu0 %1614
    %v1617 = vmul.f32 %v1538, %v1615
    %1619 = vrot.lane.b32.xlu0 %v1617, 96
    %v1620 = vpop.permute.xlu0 %1619
    %v1622 = vadd.f32 %v1611, %v1620
    %1623 = vst.msk [vmem:[%s4] sm:$0xff] %vm290, %v1622
    %v1624 = vrot.slane %v474, 1
    %v1626 = vrot.slane %v802, 7
    %v1628 = vrot.slane %v966, 6
    %v1630 = vrot.slane %v1130, 5
    %v1632 = vrot.slane %v1294, 4
    %v1634 = vrot.slane %v1458, 3
    %v1637 = vrot.slane %v1622, 2
    %vm1639 = vcmask 1040384
    %v1640 = vsel %vm1639, %v1624, %v638
    %vm1641 = vcmask 1041408
    %v1642 = vsel %vm1641, %v1640, %v1626
    %vm1643 = vcmask 1042432
    %v1644 = vsel %vm1643, %v1642, %v1628
    %vm1645 = vcmask 1043456
    %v1646 = vsel %vm1645, %v1644, %v1630
    %vm1647 = vcmask 1044480
    %v1648 = vsel %vm1647, %v1646, %v1632
    %vm1649 = vcmask 1045504
    %v1650 = vsel %vm1649, %v1648, %v1634
    %vm1651 = vcmask 1046528
    %v1652 = vsel %vm1651, %v1650, %v1637
    %v1653 = vmax.f32 %v1652, 0.0
    %v1654 = vlaneseq
    %v1655 = vshrl.u32 %v1654, 7
    %v1656 = vsub.s32 0, %v1655
    %v1657 = vrot.slane %v30, %v1656
    %v1659 = vsel %vm290, %v1653, 0
    %1661 = vmatprep.subr.mxu0 0.0
    %1662 = vmatpush1.msra.mxu0 0.0
    %1663 = vmatprep.subr.mxu0 0.0
    %1664 = vmatpush1.msra.mxu0 0.0
    %1665 = vmatprep.subr.mxu0 0.0
    %1666 = vmatpush1.msra.mxu0 0.0
    %1667 = vmatprep.subr.mxu0 0.0
    %1668 = vmatpush1.msra.mxu0 0.0
    %1669 = vmatprep.subr.mxu0 0.0
    %1670 = vmatpush1.msra.mxu0 0.0
    %1671 = vmatprep.subr.mxu0 0.0
    %1672 = vmatpush1.msra.mxu0 0.0
    %1673 = vmatprep.subr.mxu0 0.0
    %1674 = vmatpush1.msra.mxu0 0.0
    %1675 = vmatprep.subr.mxu0 0.0
    %1676 = vmatpush1.msra.mxu0 0.0
    %1677 = vmatprep.subr.mxu0 0.0
    %1678 = vmatpush1.msra.mxu0 0.0
    %1679 = vmatprep.subr.mxu0 0.0
    %1680 = vmatpush1.msra.mxu0 0.0
    %1681 = vmatprep.subr.mxu0 0.0
    %1682 = vmatpush1.msra.mxu0 0.0
    %1683 = vmatprep.subr.mxu0 0.0
    %1684 = vmatpush1.msra.mxu0 0.0
    %1685 = vmatprep.subr.mxu0 0.0
    %1686 = vmatpush1.msra.mxu0 %v26
    %1687 = vmatprep.subr.mxu0 0.0
    %1688 = vmatpush1.msra.mxu0 %v25
    %1689 = vmatprep.subr.mxu0 0.0
    %1690 = vmatpush1.msra.mxu0 %v24
    %1691 = vmatprep.subr.mxu0 0.0
    %1692 = vmatpush1.msra.mxu0 %v23
    %1693 = vmatprep.subr.mxu0 0.0
    %1694 = vmatpush2.msra.mxu0 0.0
    %1695 = vmatprep.subr.mxu0 0.0
    %1696 = vmatpush2.msra.mxu0 0.0
    %1697 = vmatprep.subr.mxu0 0.0
    %1698 = vmatpush2.msra.mxu0 0.0
    %1699 = vmatprep.subr.mxu0 0.0
    %1700 = vmatpush2.msra.mxu0 0.0
    %1701 = vmatprep.subr.mxu0 0.0
    %1702 = vmatpush2.msra.mxu0 0.0
    %1703 = vmatprep.subr.mxu0 0.0
    %1704 = vmatpush2.msra.mxu0 0.0
    %1705 = vmatprep.subr.mxu0 0.0
    %1706 = vmatpush2.msra.mxu0 0.0
    %1707 = vmatprep.subr.mxu0 0.0
    %1708 = vmatpush2.msra.mxu0 0.0
    %1709 = vmatprep.subr.mxu0 0.0
    %1710 = vmatpush2.msra.mxu0 0.0
    %1711 = vmatprep.subr.mxu0 0.0
    %1712 = vmatpush2.msra.mxu0 0.0
    %1713 = vmatprep.subr.mxu0 0.0
    %1714 = vmatpush2.msra.mxu0 0.0
    %1715 = vmatprep.subr.mxu0 0.0
    %1716 = vmatpush2.msra.mxu0 0.0
    %1717 = vmatprep.subr.mxu0 0.0
    %1718 = vmatpush2.msra.mxu0 0.0
    %1719 = vmatprep.subr.mxu0 0.0
    %1720 = vmatpush2.msra.mxu0 0.0
    %1721 = vmatprep.subr.mxu0 0.0
    %1722 = vmatpush2.msra.mxu0 0.0
    %1723 = vmatprep.subr.mxu0 0.0
    %1724 = vmatpush2.msra.mxu0 0.0
    %1725 = vmatprep.mubr.f32.mxu0 0.0
    %1726 = vmatmul.mubr.f32.gmra.mxu0 %v1659
    %v1727 = vpop.f32.mrf.mxu0
    %v1728 = vadd.f32 %v1657, %v1727
    %v1729 = vpop.f32.mrf.mxu0
    %1730 = vdwg.mxu0
    %vm1731 = vcmask 80896
    %v1732 = vsel %vm1731, %v1728, -inf
    %1733 = vmax.xlane.f32.xlu0 %v1732
    %v1734 = vpop.xlane.xlu0 %1733
    %v1735 = vsub.f32 %v1728, %v1734
    %v1736 = vmul.f32 %v1735, 1.442695
    %v1737 = vpow.pop %v1736
    %v1738 = vsel %vm1731, %v1737, 0.0
    %1739 = vadd.xlane.f32.xlu0 %v1738
    %v1740 = vpop.xlane.xlu0 %1739
    %v1741 = vlog2.pop %v1740
    %v1742 = vmul.f32 %v1741, 0.6931472
    %v1743 = vsub.f32 %v1735, %v1742
    %1744 = vst.msk [vmem:[#allocation2] sm:$0xff] %vm1731, %v1743
    // Predicated region
    $region14: #{uni_gru_forward.1} parent=1 // pred_check
      _
    $region15: #{uni_gru_forward.1} parent=1 // pred_check_branch
      %1746 = sbr.rel (0) target = $region17
    $region16: #{uni_gru_forward.1} parent=1 // pred_region
      %s1748 = ssub.s32 128, 128
      %1749 = vsyncadd [#allocation3], %s1748
      %s1751 = sshll.u32 [#allocation2], 4
      %s1752 = int_to_ptr.vmem [resolvable:$true] %s1751
      %1754 = dma.vmem_to_hbm [thread:$0]  %s1752, 128, %s3, [#allocation3]
    $region17: #{uni_gru_forward.1} parent=1 // pred_fallthru
      _
    // Predicated region
    $region18: #{uni_gru_forward.1} parent=1 // pred_check
      _
    $region19: #{uni_gru_forward.1} parent=1 // pred_check_branch
      %1756 = sbr.rel (0) target = $region21
    $region20: #{uni_gru_forward.1} parent=1 // pred_region
      _
    $region21: #{uni_gru_forward.1} parent=1 // pred_fallthru
      _
    // Predicated region
    $region22: #{uni_gru_forward.1} parent=1 // pred_check
      _
    $region23: #{uni_gru_forward.1} parent=1 // pred_check_branch
      %1758 = sbr.rel (0) target = $region25
    $region24: #{uni_gru_forward.1} parent=1 // pred_region
      %1759 = dma.done [#allocation3], 128
    $region25: #{uni_gru_forward.1} parent=1 // pred_fallthru
      _
    // Predicated region
    $region26: #{uni_gru_forward.1} parent=1 // pred_check
      _
    $region27: #{uni_gru_forward.1} parent=1 // pred_check_branch
      %1761 = sbr.rel (0) target = $region29
    $region28: #{uni_gru_forward.1} parent=1 // pred_region
      _
    $region29: #{uni_gru_forward.1} parent=1 // pred_fallthru
      _
    %1762 = vsyncpa [#allocation3], 1

</llo_original>
